<compile_context>
chip_gen: v7x
topology: tpu7x:2x2x1
jax: 0.10.0
libtpu: 0.0.40
codegen_flags: <defaults>
</compile_context>

<pallas_src>
import jax
import jax.numpy as jnp
from jax.experimental import pallas as pl
from jax.experimental.pallas import tpu as pltpu

NUM_CLASSES = 6
NUM_NODE_FEATURES = 33
LANE = 128          # lane-dense padded class dim (sliced back to 6 in the wrapper)
F_PAD = 48          # NUM_NODE_FEATURES padded to a multiple of 16 (bf16 sublane pack)


def _graphsage_kernel(a_ref, p_ref, x_ref,
                      w1_ref, w2_ref, wlin_ref, bias_ref,
                      out_ref):
    bf16 = jnp.bfloat16
    H = w2_ref.shape[0]                 # hidden width (static at trace time)

    a = a_ref[...]                      # [N, N]   bf16 row-normalized adjacency
    x = x_ref[...]                      # [N, Fp]  bf16 node features (zero-padded)
    bias = bias_ref[...]                # [8, 128] f32 packed biases
    b1 = bias[0:1, :H]                  # [1, H]
    b2 = bias[1:2, :H]                  # [1, H]
    blin = bias[2:3, :]                 # [1, 128]

    # ---- SAGEConv 1: lin_l(mean_j x_j) + lin_r(x_i), then ReLU ----
    # Single lane-dense transform: X @ [Wl | Wr] -> [N, 2H], split afterwards.
    # Reassociated aggregation: A @ (X @ Wl) == (A @ X) @ Wl.
    xc = jnp.dot(x, w1_ref[...], preferred_element_type=jnp.float32)         # [N, 2H]
    xl, xr = xc[:, :H], xc[:, H:]
    agg1 = jnp.dot(a, xl.astype(bf16), preferred_element_type=jnp.float32)   # [N, H]
    h1 = jnp.maximum(agg1 + xr + b1, 0.0)                                    # [N, H] f32
    h1b = h1.astype(bf16)

    # ---- SAGEConv 2 ----
    hc = jnp.dot(h1b, w2_ref[...], preferred_element_type=jnp.float32)       # [N, 2H]
    hl, hr = hc[:, :H], hc[:, H:]
    agg2 = jnp.dot(a, hl.astype(bf16), preferred_element_type=jnp.float32)   # [N, H]
    h2 = agg2 + hr + b2                                                      # [N, H] f32

    # ---- global_mean_pool ----
    pooled = jnp.dot(p_ref[...], h2.astype(bf16),
                     preferred_element_type=jnp.float32)                     # [G, H]

    # TODO(synk): F.dropout(p=0.5, training=self.training) — identity (inference
    # mode); training-mode dropout would need pltpu.prng_seed/prng_random_bits.

    # ---- final Linear (lane-dense: classes padded to 128 output lanes) ----
    out_ref[...] = (jnp.dot(pooled.astype(bf16), wlin_ref[...],
                            preferred_element_type=jnp.float32)
                    + blin)                                                  # [G, 128]


def graphsage_forward(a_norm, pool, x, params):
    """Runs the whole graphSAGE forward in one fused Pallas call."""
    N = x.shape[0]
    G = pool.shape[0]
    H = params["wl1"].shape[1]
    bf16 = jnp.bfloat16

    # bf16 casts, zero-padding and weight/bias packing done once in the wrapper
    # (identical math: padded feature columns hit zero weight rows; padded class
    # lanes are sliced off).
    x_p = jnp.zeros((N, F_PAD), bf16).at[:, :NUM_NODE_FEATURES].set(x.astype(bf16))

    w1 = jnp.zeros((F_PAD, 2 * H), bf16)
    w1 = w1.at[:NUM_NODE_FEATURES, :H].set(params["wl1"].astype(bf16))
    w1 = w1.at[:NUM_NODE_FEATURES, H:].set(params["wr1"].astype(bf16))

    w2 = jnp.concatenate([params["wl2"], params["wr2"]], axis=1).astype(bf16)  # [H, 2H]

    wlin = jnp.zeros((H, LANE), bf16).at[:, :NUM_CLASSES].set(params["wlin"].astype(bf16))

    bias = jnp.zeros((8, LANE), jnp.float32)
    bias = bias.at[0, :H].set(params["b1"][0])
    bias = bias.at[1, :H].set(params["b2"][0])
    bias = bias.at[2, :NUM_CLASSES].set(params["blin"][0])

    flops = int(2 * (N * F_PAD * 2 * H          # x @ [wl1|wr1]
                     + 2 * N * N * H            # a @ xl, a @ hl
                     + N * H * 2 * H            # h1 @ [wl2|wr2]
                     + G * N * H                # pooling
                     + G * H * LANE))           # final linear (padded)
    bytes_accessed = int(2 * (N * N + G * N + N * F_PAD + F_PAD * 2 * H
                              + H * 2 * H + H * LANE)         # bf16 operands
                         + 4 * (8 * LANE + G * LANE))          # f32 biases + output

    vmem = pl.BlockSpec(memory_space=pltpu.MemorySpace.VMEM)
    out_pad = pl.pallas_call(
        _graphsage_kernel,
        out_shape=jax.ShapeDtypeStruct((G, LANE), jnp.float32),
        in_specs=[vmem] * 7,
        out_specs=vmem,
        compiler_params=pltpu.CompilerParams(vmem_limit_bytes=32 * 1024 * 1024),
        cost_estimate=pl.CostEstimate(flops=flops, transcendentals=0,
                                      bytes_accessed=bytes_accessed),
    )(a_norm.astype(bf16), pool.astype(bf16), x_p, w1, w2, wlin, bias)
    return out_pad[:, :NUM_CLASSES]


# ----------------------- plain-JAX glue -----------------------

def build_adjacency(edge_index, num_nodes):
    """Row-normalized adjacency: A[i, j] = (#edges j->i) / deg_in(i).

    Uses .add (not .set) so duplicate edges count as separate messages, matching
    PyG SAGEConv mean aggregation.
    """
    src, dst = edge_index[0], edge_index[1]
    a = jnp.zeros((num_nodes, num_nodes), jnp.float32).at[dst, src].add(1.0)
    deg = a.sum(axis=1, keepdims=True)
    return a / jnp.maximum(deg, 1.0)


def build_pool_matrix(batch, num_graphs, num_nodes):
    """P[g, i] = 1/|V_g| if batch[i] == g else 0."""
    onehot = (batch[None, :] == jnp.arange(num_graphs)[:, None]).astype(jnp.float32)
    counts = onehot.sum(axis=1, keepdims=True)
    return onehot / jnp.maximum(counts, 1.0)


def init_params(key, hidden):
    """Deterministic synthetic init (shapes match SAGEConv/Linear of the module)."""
    ks = jax.random.split(key, 7)
    def u(k, shape, fan_in):
        bound = 1.0 / jnp.sqrt(float(fan_in))
        return jax.random.uniform(k, shape, jnp.float32, -bound, bound)
    F, H, C = NUM_NODE_FEATURES, hidden, NUM_CLASSES
    return {
        # SAGEConv1: lin_l (neighbors, with bias), lin_r (root, no bias)
        "wl1": u(ks[0], (F, H), F), "wr1": u(ks[1], (F, H), F),
        "b1": u(ks[2], (1, H), F),
        # SAGEConv2
        "wl2": u(ks[3], (H, H), H), "wr2": u(ks[4], (H, H), H),
        "b2": u(ks[5], (1, H), H),
        # final Linear
        "wlin": u(ks[6], (H, C), H),
        "blin": jnp.zeros((1, C), jnp.float32),
    }


def reference_forward(a_norm, pool, x, p):
    """Pure-JAX f32 reference matching the original module's forward."""
    h1 = jnp.maximum(a_norm @ x @ p["wl1"] + x @ p["wr1"] + p["b1"], 0.0)
    h2 = a_norm @ h1 @ p["wl2"] + h1 @ p["wr2"] + p["b2"]
    return pool @ h2 @ p["wlin"] + p["blin"]


if __name__ == "__main__":
    key = jax.random.PRNGKey(0)
    k_x, k_e, k_p = jax.random.split(key, 3)

    # MXU/sublane-friendly batch: 8 graphs x 32 nodes = 256 node rows, hidden=64
    # (concatenated weight matmuls are 128 lanes wide, outputs fill 8 sublanes).
    G, NODES_PER_GRAPH, E_PER_GRAPH, HIDDEN = 8, 32, 64, 64
    N = G * NODES_PER_GRAPH

    x = jax.random.normal(k_x, (N, NUM_NODE_FEATURES), jnp.float32)

    # Edges are intra-graph (as in a batched PyG Data object).
    edges = []
    for g in range(G):
        kg = jax.random.fold_in(k_e, g)
        e = jax.random.randint(kg, (2, E_PER_GRAPH), 0, NODES_PER_GRAPH,
                               dtype=jnp.int32) + g * NODES_PER_GRAPH
        edges.append(e)
    edge_index = jnp.concatenate(edges, axis=1)
    batch = jnp.repeat(jnp.arange(G, dtype=jnp.int32), NODES_PER_GRAPH)

    a_norm = build_adjacency(edge_index, N)
    pool = build_pool_matrix(batch, G, N)
    params = init_params(k_p, HIDDEN)

    out = graphsage_forward(a_norm, pool, x, params)
    out = jax.block_until_ready(out)

    ref = reference_forward(a_norm, pool, x, params)
    assert out.shape == (G, NUM_CLASSES)
    assert jnp.allclose(out, ref, rtol=2e-2, atol=2e-2), "mismatch vs reference"

    print("KERNEL_OK")
</pallas_src>

<mosaic_0001>
module attributes {stable_mosaic.version = 11 : i64} {
  func.func @_graphsage_kernel(%arg0: memref<256x256xbf16, #tpu.memory_space<vmem>>, %arg1: memref<8x256xbf16, #tpu.memory_space<vmem>>, %arg2: memref<256x48xbf16, #tpu.memory_space<vmem>>, %arg3: memref<48x128xbf16, #tpu.memory_space<vmem>>, %arg4: memref<64x128xbf16, #tpu.memory_space<vmem>>, %arg5: memref<64x128xbf16, #tpu.memory_space<vmem>>, %arg6: memref<8x128xf32, #tpu.memory_space<vmem>>, %arg7: memref<8x128xf32, #tpu.memory_space<vmem>>) attributes {dimension_semantics = [], scalar_prefetch = 0 : i64, scratch_operands = 0 : i64, tpu.core_type = #tpu.core_type<tc>} {
    %c0 = arith.constant 0 : index
    %c0_0 = arith.constant 0 : index
    %0 = vector.load %arg0[%c0, %c0_0] : memref<256x256xbf16, #tpu.memory_space<vmem>>, vector<256x256xbf16>
    %c0_1 = arith.constant 0 : index
    %c0_2 = arith.constant 0 : index
    %1 = vector.load %arg2[%c0_1, %c0_2] : memref<256x48xbf16, #tpu.memory_space<vmem>>, vector<256x48xbf16>
    %c0_3 = arith.constant 0 : index
    %c0_4 = arith.constant 0 : index
    %2 = vector.load %arg6[%c0_3, %c0_4] : memref<8x128xf32, #tpu.memory_space<vmem>>, vector<8x128xf32>
    %3 = vector.extract_strided_slice %2 {offsets = [0, 0], sizes = [1, 64], strides = [1, 1]} : vector<8x128xf32> to vector<1x64xf32>
    %4 = vector.extract_strided_slice %2 {offsets = [1, 0], sizes = [1, 64], strides = [1, 1]} : vector<8x128xf32> to vector<1x64xf32>
    %5 = vector.extract_strided_slice %2 {offsets = [2, 0], sizes = [1, 128], strides = [1, 1]} : vector<8x128xf32> to vector<1x128xf32>
    %c0_5 = arith.constant 0 : index
    %c0_6 = arith.constant 0 : index
    %6 = vector.load %arg3[%c0_5, %c0_6] : memref<48x128xbf16, #tpu.memory_space<vmem>>, vector<48x128xbf16>
    %cst = arith.constant dense<0.000000e+00> : vector<256x128xf32>
    %7 = tpu.matmul %1, %6, %cst {dimension_numbers = #tpu.dot_dimension_numbers<[1], [0], [0], [1], [0, 0, 1, 1], [], []>} : vector<256x48xbf16>, vector<48x128xbf16>, vector<256x128xf32> -> vector<256x128xf32>
    %8 = vector.extract_strided_slice %7 {offsets = [0, 0], sizes = [256, 64], strides = [1, 1]} : vector<256x128xf32> to vector<256x64xf32>
    %9 = vector.extract_strided_slice %7 {offsets = [0, 64], sizes = [256, 64], strides = [1, 1]} : vector<256x128xf32> to vector<256x64xf32>
    %10 = arith.truncf %8 : vector<256x64xf32> to vector<256x64xbf16>
    %cst_7 = arith.constant dense<0.000000e+00> : vector<256x64xf32>
    %11 = tpu.matmul %0, %10, %cst_7 {dimension_numbers = #tpu.dot_dimension_numbers<[1], [0], [0], [1], [0, 0, 1, 1], [], []>} : vector<256x256xbf16>, vector<256x64xbf16>, vector<256x64xf32> -> vector<256x64xf32>
    %12 = arith.addf %11, %9 : vector<256x64xf32>
    %13 = vector.broadcast %3 : vector<1x64xf32> to vector<256x64xf32>
    %14 = arith.addf %12, %13 : vector<256x64xf32>
    %cst_8 = arith.constant 0.000000e+00 : f32
    %15 = vector.broadcast %cst_8 : f32 to vector<256x64xf32>
    %16 = arith.maximumf %14, %15 : vector<256x64xf32>
    %17 = arith.truncf %16 : vector<256x64xf32> to vector<256x64xbf16>
    %c0_9 = arith.constant 0 : index
    %c0_10 = arith.constant 0 : index
    %18 = vector.load %arg4[%c0_9, %c0_10] : memref<64x128xbf16, #tpu.memory_space<vmem>>, vector<64x128xbf16>
    %cst_11 = arith.constant dense<0.000000e+00> : vector<256x128xf32>
    %19 = tpu.matmul %17, %18, %cst_11 {dimension_numbers = #tpu.dot_dimension_numbers<[1], [0], [0], [1], [0, 0, 1, 1], [], []>} : vector<256x64xbf16>, vector<64x128xbf16>, vector<256x128xf32> -> vector<256x128xf32>
    %20 = vector.extract_strided_slice %19 {offsets = [0, 0], sizes = [256, 64], strides = [1, 1]} : vector<256x128xf32> to vector<256x64xf32>
    %21 = vector.extract_strided_slice %19 {offsets = [0, 64], sizes = [256, 64], strides = [1, 1]} : vector<256x128xf32> to vector<256x64xf32>
    %22 = arith.truncf %20 : vector<256x64xf32> to vector<256x64xbf16>
    %cst_12 = arith.constant dense<0.000000e+00> : vector<256x64xf32>
    %23 = tpu.matmul %0, %22, %cst_12 {dimension_numbers = #tpu.dot_dimension_numbers<[1], [0], [0], [1], [0, 0, 1, 1], [], []>} : vector<256x256xbf16>, vector<256x64xbf16>, vector<256x64xf32> -> vector<256x64xf32>
    %24 = arith.addf %23, %21 : vector<256x64xf32>
    %25 = vector.broadcast %4 : vector<1x64xf32> to vector<256x64xf32>
    %26 = arith.addf %24, %25 : vector<256x64xf32>
    %c0_13 = arith.constant 0 : index
    %c0_14 = arith.constant 0 : index
    %27 = vector.load %arg1[%c0_13, %c0_14] : memref<8x256xbf16, #tpu.memory_space<vmem>>, vector<8x256xbf16>
    %28 = arith.truncf %26 : vector<256x64xf32> to vector<256x64xbf16>
    %cst_15 = arith.constant dense<0.000000e+00> : vector<8x64xf32>
    %29 = tpu.matmul %27, %28, %cst_15 {dimension_numbers = #tpu.dot_dimension_numbers<[1], [0], [0], [1], [0, 0, 1, 1], [], []>} : vector<8x256xbf16>, vector<256x64xbf16>, vector<8x64xf32> -> vector<8x64xf32>
    %30 = arith.truncf %29 : vector<8x64xf32> to vector<8x64xbf16>
    %c0_16 = arith.constant 0 : index
    %c0_17 = arith.constant 0 : index
    %31 = vector.load %arg5[%c0_16, %c0_17] : memref<64x128xbf16, #tpu.memory_space<vmem>>, vector<64x128xbf16>
    %cst_18 = arith.constant dense<0.000000e+00> : vector<8x128xf32>
    %32 = tpu.matmul %30, %31, %cst_18 {dimension_numbers = #tpu.dot_dimension_numbers<[1], [0], [0], [1], [0, 0, 1, 1], [], []>} : vector<8x64xbf16>, vector<64x128xbf16>, vector<8x128xf32> -> vector<8x128xf32>
    %33 = vector.broadcast %5 : vector<1x128xf32> to vector<8x128xf32>
    %34 = arith.addf %32, %33 : vector<8x128xf32>
    %c0_19 = arith.constant 0 : index
    %c0_20 = arith.constant 0 : index
    %35 = vector.load %arg7[%c0_19, %c0_20] : memref<8x128xf32, #tpu.memory_space<vmem>>, vector<8x128xf32>
    tpu.vector_store %arg7[%c0_19, %c0_20], %34 {strides = array<i32>} : memref<8x128xf32, #tpu.memory_space<vmem>>, vector<8x128xf32>,
    return
  }
}

</mosaic_0001>

<llo_original>
// kernel: tpu_custom_call.1
$region0: #{tpu_custom_call.1}
  #allocation0 [shape = 'u32[]', space=smem, size = 0x4, offset = 0x4, fixed_abs, tag = 'smem constant byte address 0x4 - core index']
  #allocation1 [shape = 'u32[144,128]{1,0:T(1,128)}', space=vmem, size = 0x12000, scoped, tag = 'internal scratch']
  %s0 = inlined_call_operand.hbm [shape: bf16[256,256], index: 0, kind: input, shape index: {}]
  %s1 = inlined_call_operand.vmem [shape: bf16[8,256], index: 1, kind: input, shape index: {}]
  %s2 = inlined_call_operand.vmem [shape: bf16[256,48], index: 2, kind: input, shape index: {}]
  %s3 = inlined_call_operand.vmem [shape: bf16[48,128], index: 3, kind: input, shape index: {}]
  %s4 = inlined_call_operand.vmem [shape: bf16[64,128], index: 4, kind: input, shape index: {}]
  %s5 = inlined_call_operand.vmem [shape: bf16[64,128], index: 5, kind: input, shape index: {}]
  %s6 = inlined_call_operand.vmem [shape: f32[8,128], index: 6, kind: input, shape index: {}]
  %s7 = inlined_call_operand.hbm [shape: f32[8,128], index: 7, kind: output, shape index: {}]
  %s8 = sld [smem:[#allocation0]]
  $region42: #{tpu_custom_call.1} parent=0
    _
  %s10 = ssub.s32 1, %s8
  %s11 = scalar_select 0, %s10, %s8
  $region1: #{tpu_custom_call.1} parent=0
    #allocation2 [shape = 'u8[131072]{0}', space=vmem, size = 0x20000, scoped, tag = 'input window, operand 0, single buffered']
    #allocation3 [shape = 's32[1]{0}', space=sflag, size = 0x4, scoped, tag = 'scoped memory for tpu_custom_call.1']
    #allocation4 [shape = 's32[1]{0}', space=sflag, size = 0x4, scoped, tag = 'scoped memory for tpu_custom_call.1']
    #allocation5 [shape = 'u8[4096]{0}', space=vmem, size = 0x1000, scoped, tag = 'output window, operand 0, single buffered']
    %12 = vsyncpa [#allocation3], 0
    %13 = vsyncpa [#allocation4], 0
    // Predicated region
    $region2: #{tpu_custom_call.1} parent=1 // pred_check
      _
    $region3: #{tpu_custom_call.1} parent=1 // pred_check_branch
      %15 = sbr.rel (0) target = $region5
    $region4: #{tpu_custom_call.1} parent=1 // pred_region
      %s17 = ssub.s32 4096, 4096
      %18 = vsyncadd [#allocation3], %s17
      %s19 = sshll.u32 [#allocation2], 4
      %s20 = int_to_ptr.vmem [resolvable:$true] %s19
      %25 = dma.hbm_to_vmem [thread:$0]  %s0, 4096, %s20, [#allocation3], 128, 128, 8
    $region5: #{tpu_custom_call.1} parent=1 // pred_fallthru
      _
    // Predicated region
    $region6: #{tpu_custom_call.1} parent=1 // pred_check
      _
    $region7: #{tpu_custom_call.1} parent=1 // pred_check_branch
      %27 = sbr.rel (0) target = $region9
    $region8: #{tpu_custom_call.1} parent=1 // pred_region
      _
    $region9: #{tpu_custom_call.1} parent=1 // pred_fallthru
      _
    // Predicated region
    $region10: #{tpu_custom_call.1} parent=1 // pred_check
      _
    $region11: #{tpu_custom_call.1} parent=1 // pred_check_branch
      %29 = sbr.rel (0) target = $region13
    $region12: #{tpu_custom_call.1} parent=1 // pred_region
      _
    $region13: #{tpu_custom_call.1} parent=1 // pred_fallthru
      _
    // Predicated region
    $region14: #{tpu_custom_call.1} parent=1 // pred_check
      _
    $region15: #{tpu_custom_call.1} parent=1 // pred_check_branch
      %31 = sbr.rel (0) target = $region17
    $region16: #{tpu_custom_call.1} parent=1 // pred_region
      _
    $region17: #{tpu_custom_call.1} parent=1 // pred_fallthru
      _
    // Predicated region
    $region18: #{tpu_custom_call.1} parent=1 // pred_check
      _
    $region19: #{tpu_custom_call.1} parent=1 // pred_check_branch
      %33 = sbr.rel (0) target = $region21
    $region20: #{tpu_custom_call.1} parent=1 // pred_region
      _
    $region21: #{tpu_custom_call.1} parent=1 // pred_fallthru
      _
    // Predicated region
    $region22: #{tpu_custom_call.1} parent=1 // pred_check
      _
    $region23: #{tpu_custom_call.1} parent=1 // pred_check_branch
      %35 = sbr.rel (0) target = $region25
    $region24: #{tpu_custom_call.1} parent=1 // pred_region
      _
    $region25: #{tpu_custom_call.1} parent=1 // pred_fallthru
      _
    // Predicated region
    $region26: #{tpu_custom_call.1} parent=1 // pred_check
      _
    $region27: #{tpu_custom_call.1} parent=1 // pred_check_branch
      %37 = sbr.rel (0) target = $region29
    $region28: #{tpu_custom_call.1} parent=1 // pred_region
      _
    $region29: #{tpu_custom_call.1} parent=1 // pred_fallthru
      _
    // Predicated region
    $region30: #{tpu_custom_call.1} parent=1 // pred_check
      _
    $region31: #{tpu_custom_call.1} parent=1 // pred_check_branch
      %39 = sbr.rel (0) target = $region33
    $region32: #{tpu_custom_call.1} parent=1 // pred_region
      %40 = dma.done [#allocation3], 4096
    $region33: #{tpu_custom_call.1} parent=1 // pred_fallthru
      _
    %v42 = vld [vmem:[#allocation2] sm:$0xff]
    %v43 = vld [vmem:[#allocation2 + $0x8] sm:$0xff]
    %v44 = vld [vmem:[#allocation2 + $0x10] sm:$0xff]
    %v45 = vld [vmem:[#allocation2 + $0x18] sm:$0xff]
    %v46 = vld [vmem:[#allocation2 + $0x20] sm:$0xff]
    %v47 = vld [vmem:[#allocation2 + $0x28] sm:$0xff]
    %v48 = vld [vmem:[#allocation2 + $0x30] sm:$0xff]
    %v49 = vld [vmem:[#allocation2 + $0x38] sm:$0xff]
    %v50 = vld [vmem:[#allocation2 + $0x40] sm:$0xff]
    %v51 = vld [vmem:[#allocation2 + $0x48] sm:$0xff]
    %v52 = vld [vmem:[#allocation2 + $0x50] sm:$0xff]
    %v53 = vld [vmem:[#allocation2 + $0x58] sm:$0xff]
    %v54 = vld [vmem:[#allocation2 + $0x60] sm:$0xff]
    %v55 = vld [vmem:[#allocation2 + $0x68] sm:$0xff]
    %v56 = vld [vmem:[#allocation2 + $0x70] sm:$0xff]
    %v57 = vld [vmem:[#allocation2 + $0x78] sm:$0xff]
    %v58 = vld [vmem:[#allocation2 + $0x80] sm:$0xff]
    %v59 = vld [vmem:[#allocation2 + $0x88] sm:$0xff]
    %v60 = vld [vmem:[#allocation2 + $0x90] sm:$0xff]
    %v61 = vld [vmem:[#allocation2 + $0x98] sm:$0xff]
    %v62 = vld [vmem:[#allocation2 + $0xa0] sm:$0xff]
    %v63 = vld [vmem:[#allocation2 + $0xa8] sm:$0xff]
    %v64 = vld [vmem:[#allocation2 + $0xb0] sm:$0xff]
    %v65 = vld [vmem:[#allocation2 + $0xb8] sm:$0xff]
    %v66 = vld [vmem:[#allocation2 + $0xc0] sm:$0xff]
    %v67 = vld [vmem:[#allocation2 + $0xc8] sm:$0xff]
    %v68 = vld [vmem:[#allocation2 + $0xd0] sm:$0xff]
    %v69 = vld [vmem:[#allocation2 + $0xd8] sm:$0xff]
    %v70 = vld [vmem:[#allocation2 + $0xe0] sm:$0xff]
    %v71 = vld [vmem:[#allocation2 + $0xe8] sm:$0xff]
    %v72 = vld [vmem:[#allocation2 + $0xf0] sm:$0xff]
    %v73 = vld [vmem:[#allocation2 + $0xf8] sm:$0xff]
    %v74 = vld [vmem:[%s2] sm:$0xf]
    %v75 = vld [vmem:[%s2 + $0x4] sm:$0xf]
    %v76 = vld [vmem:[%s2 + $0x8] sm:$0xf]
    %v77 = vld [vmem:[%s2 + $0xc] sm:$0xf]
    %v78 = vld [vmem:[%s2 + $0x10] sm:$0xf]
    %v79 = vld [vmem:[%s2 + $0x14] sm:$0xf]
    %v80 = vld [vmem:[%s2 + $0x18] sm:$0xf]
    %v81 = vld [vmem:[%s2 + $0x1c] sm:$0xf]
    %v82 = vld [vmem:[%s2 + $0x20] sm:$0xf]
    %v83 = vld [vmem:[%s2 + $0x24] sm:$0xf]
    %v84 = vld [vmem:[%s2 + $0x28] sm:$0xf]
    %v85 = vld [vmem:[%s2 + $0x2c] sm:$0xf]
    %v86 = vld [vmem:[%s2 + $0x30] sm:$0xf]
    %v87 = vld [vmem:[%s2 + $0x34] sm:$0xf]
    %v88 = vld [vmem:[%s2 + $0x38] sm:$0xf]
    %v89 = vld [vmem:[%s2 + $0x3c] sm:$0xf]
    %v90 = vld [vmem:[%s2 + $0x40] sm:$0xf]
    %v91 = vld [vmem:[%s2 + $0x44] sm:$0xf]
    %v92 = vld [vmem:[%s2 + $0x48] sm:$0xf]
    %v93 = vld [vmem:[%s2 + $0x4c] sm:$0xf]
    %v94 = vld [vmem:[%s2 + $0x50] sm:$0xf]
    %v95 = vld [vmem:[%s2 + $0x54] sm:$0xf]
    %v96 = vld [vmem:[%s2 + $0x58] sm:$0xf]
    %v97 = vld [vmem:[%s2 + $0x5c] sm:$0xf]
    %v98 = vld [vmem:[%s2 + $0x60] sm:$0xf]
    %v99 = vld [vmem:[%s2 + $0x64] sm:$0xf]
    %v100 = vld [vmem:[%s2 + $0x68] sm:$0xf]
    %v101 = vld [vmem:[%s2 + $0x6c] sm:$0xf]
    %v102 = vld [vmem:[%s2 + $0x70] sm:$0xf]
    %v103 = vld [vmem:[%s2 + $0x74] sm:$0xf]
    %v104 = vld [vmem:[%s2 + $0x78] sm:$0xf]
    %v105 = vld [vmem:[%s2 + $0x7c] sm:$0xf]
    %v106 = vld [vmem:[%s6] sm:$0xff]
    %v107 = vld [vmem:[%s3] sm:$0xf]
    %v108 = vld [vmem:[%s3 + $0x4] sm:$0xf]
    %v109 = vld [vmem:[%s3 + $0x8] sm:$0xf]
    %v110 = vld [vmem:[%s3 + $0xc] sm:$0xf]
    %v111 = vld [vmem:[%s3 + $0x10] sm:$0xf]
    %v112 = vld [vmem:[%s3 + $0x14] sm:$0xf]
    %v145 = vunpack.c.l.b16 %v74
    %v146 = vunpack.c.l.b16 %v75
    %v147 = vunpack.c.l.b16 %v76
    %v148 = vunpack.c.l.b16 %v77
    %v149 = vunpack.c.l.b16 %v78
    %v150 = vunpack.c.l.b16 %v79
    %v151 = vunpack.c.l.b16 %v80
    %v152 = vunpack.c.l.b16 %v81
    %v153 = vunpack.c.l.b16 %v82
    %v154 = vunpack.c.l.b16 %v83
    %v155 = vunpack.c.l.b16 %v84
    %v156 = vunpack.c.l.b16 %v85
    %v157 = vunpack.c.l.b16 %v86
    %v158 = vunpack.c.l.b16 %v87
    %v159 = vunpack.c.l.b16 %v88
    %v160 = vunpack.c.l.b16 %v89
    %v161 = vunpack.c.l.b16 %v90
    %v162 = vunpack.c.l.b16 %v91
    %v163 = vunpack.c.l.b16 %v92
    %v164 = vunpack.c.l.b16 %v93
    %v165 = vunpack.c.l.b16 %v94
    %v166 = vunpack.c.l.b16 %v95
    %v167 = vunpack.c.l.b16 %v96
    %v168 = vunpack.c.l.b16 %v97
    %v169 = vunpack.c.l.b16 %v98
    %v170 = vunpack.c.l.b16 %v99
    %v171 = vunpack.c.l.b16 %v100
    %v172 = vunpack.c.l.b16 %v101
    %v173 = vunpack.c.l.b16 %v102
    %v174 = vunpack.c.l.b16 %v103
    %v175 = vunpack.c.l.b16 %v104
    %v176 = vunpack.c.l.b16 %v105
    %v177 = vpack.c.b16 %v146, %v145
    %v178 = vpack.c.b16 %v148, %v147
    %v179 = vpack.c.b16 %v150, %v149
    %v180 = vpack.c.b16 %v152, %v151
    %v181 = vpack.c.b16 %v154, %v153
    %v182 = vpack.c.b16 %v156, %v155
    %v183 = vpack.c.b16 %v158, %v157
    %v184 = vpack.c.b16 %v160, %v159
    %v185 = vpack.c.b16 %v162, %v161
    %v186 = vpack.c.b16 %v164, %v163
    %v187 = vpack.c.b16 %v166, %v165
    %v188 = vpack.c.b16 %v168, %v167
    %v189 = vpack.c.b16 %v170, %v169
    %v190 = vpack.c.b16 %v172, %v171
    %v191 = vpack.c.b16 %v174, %v173
    %v192 = vpack.c.b16 %v176, %v175
    %v199 = vunpack.c.l.b16 %v107
    %v200 = vunpack.c.l.b16 %v108
    %v201 = vunpack.c.l.b16 %v109
    %v202 = vunpack.c.l.b16 %v110
    %v203 = vunpack.c.l.b16 %v111
    %v204 = vunpack.c.l.b16 %v112
    %v205 = vpack.c.b16 %v200, %v199
    %v206 = vpack.c.b16 %v202, %v201
    %v207 = vpack.c.b16 %v204, %v203
    %vm211 = vcmask 392192
    %v213 = vsel %vm211, %v177, 0
    %v216 = vsel %vm211, %v178, 0
    %v219 = vsel %vm211, %v179, 0
    %v222 = vsel %vm211, %v180, 0
    %v225 = vsel %vm211, %v181, 0
    %v228 = vsel %vm211, %v182, 0
    %v231 = vsel %vm211, %v183, 0
    %v234 = vsel %vm211, %v184, 0
    %v237 = vsel %vm211, %v185, 0
    %v240 = vsel %vm211, %v186, 0
    %v243 = vsel %vm211, %v187, 0
    %v246 = vsel %vm211, %v188, 0
    %v249 = vsel %vm211, %v189, 0
    %v252 = vsel %vm211, %v190, 0
    %v255 = vsel %vm211, %v191, 0
    %v258 = vsel %vm211, %v192, 0
    %260 = vmatprep.subr.bf16.mxu0 0
    %261 = vmatpush1.bf16.msra.mxu0 %v205
    %262 = vmatprep.subr.bf16.mxu0 0
    %263 = vmatpush1.bf16.msra.mxu0 %v206
    %264 = vmatprep.subr.bf16.mxu0 0
    %265 = vmatpush1.bf16.msra.mxu0 %v207
    %266 = vmatprep.subr.bf16.mxu0 0
    %267 = vmatpush1.bf16.msra.mxu0 0
    %268 = vmatprep.subr.bf16.mxu0 0
    %269 = vmatpush1.bf16.msra.mxu0 0
    %270 = vmatprep.subr.bf16.mxu0 0
    %271 = vmatpush1.bf16.msra.mxu0 0
    %272 = vmatprep.subr.bf16.mxu0 0
    %273 = vmatpush1.bf16.msra.mxu0 0
    %274 = vmatprep.subr.bf16.mxu0 0
    %275 = vmatpush1.bf16.msra.mxu0 0
    %276 = vmatprep.subr.bf16.mxu0 0
    %277 = vmatpush1.bf16.msra.mxu0 0
    %278 = vmatprep.subr.bf16.mxu0 0
    %279 = vmatpush1.bf16.msra.mxu0 0
    %280 = vmatprep.subr.bf16.mxu0 0
    %281 = vmatpush1.bf16.msra.mxu0 0
    %282 = vmatprep.subr.bf16.mxu0 0
    %283 = vmatpush1.bf16.msra.mxu0 0
    %284 = vmatprep.subr.bf16.mxu0 0
    %285 = vmatpush1.bf16.msra.mxu0 0
    %286 = vmatprep.subr.bf16.mxu0 0
    %287 = vmatpush1.bf16.msra.mxu0 0
    %288 = vmatprep.subr.bf16.mxu0 0
    %289 = vmatpush1.bf16.msra.mxu0 0
    %290 = vmatprep.subr.bf16.mxu0 0
    %291 = vmatpush1.bf16.msra.mxu0 0
    %292 = vmatprep.mubr.bf16.mxu0 0
    %293 = vmatmul.mubr.bf16.gmra.mrb[0].mxu0 %v213
    %v294 = vpop.f32.mrb[0].mxu0
    %v295 = vadd.f32 0.0, %v294
    %v296 = vpop.f32.mrb[0].mxu0
    %v297 = vpop.f32.mrb[0].mxu0
    %v298 = vadd.f32 0.0, %v297
    %v299 = vpop.f32.mrb[0].mxu0
    %300 = vmatprep.mubr.bf16.mxu0 0
    %301 = vmatmul.mubr.bf16.gmra.mrb[0].mxu0 %v216
    %v302 = vpop.f32.mrb[0].mxu0
    %v303 = vadd.f32 0.0, %v302
    %v304 = vpop.f32.mrb[0].mxu0
    %v305 = vpop.f32.mrb[0].mxu0
    %v306 = vadd.f32 0.0, %v305
    %v307 = vpop.f32.mrb[0].mxu0
    %308 = vmatprep.mubr.bf16.mxu0 0
    %309 = vmatmul.mubr.bf16.gmra.mrb[0].mxu0 %v219
    %v310 = vpop.f32.mrb[0].mxu0
    %v311 = vadd.f32 0.0, %v310
    %v312 = vpop.f32.mrb[0].mxu0
    %v313 = vpop.f32.mrb[0].mxu0
    %v314 = vadd.f32 0.0, %v313
    %v315 = vpop.f32.mrb[0].mxu0
    %316 = vmatprep.mubr.bf16.mxu0 0
    %317 = vmatmul.mubr.bf16.gmra.mrb[0].mxu0 %v222
    %v318 = vpop.f32.mrb[0].mxu0
    %v319 = vadd.f32 0.0, %v318
    %v320 = vpop.f32.mrb[0].mxu0
    %v321 = vpop.f32.mrb[0].mxu0
    %v322 = vadd.f32 0.0, %v321
    %v323 = vpop.f32.mrb[0].mxu0
    %324 = vmatprep.mubr.bf16.mxu0 0
    %325 = vmatmul.mubr.bf16.gmra.mrb[0].mxu0 %v225
    %v326 = vpop.f32.mrb[0].mxu0
    %v327 = vadd.f32 0.0, %v326
    %v328 = vpop.f32.mrb[0].mxu0
    %v329 = vpop.f32.mrb[0].mxu0
    %v330 = vadd.f32 0.0, %v329
    %v331 = vpop.f32.mrb[0].mxu0
    %332 = vmatprep.mubr.bf16.mxu0 0
    %333 = vmatmul.mubr.bf16.gmra.mrb[0].mxu0 %v228
    %v334 = vpop.f32.mrb[0].mxu0
    %v335 = vadd.f32 0.0, %v334
    %v336 = vpop.f32.mrb[0].mxu0
    %v337 = vpop.f32.mrb[0].mxu0
    %v338 = vadd.f32 0.0, %v337
    %v339 = vpop.f32.mrb[0].mxu0
    %340 = vmatprep.mubr.bf16.mxu0 0
    %341 = vmatmul.mubr.bf16.gmra.mrb[0].mxu0 %v231
    %v342 = vpop.f32.mrb[0].mxu0
    %v343 = vadd.f32 0.0, %v342
    %v344 = vpop.f32.mrb[0].mxu0
    %v345 = vpop.f32.mrb[0].mxu0
    %v346 = vadd.f32 0.0, %v345
    %v347 = vpop.f32.mrb[0].mxu0
    %348 = vmatprep.mubr.bf16.mxu0 0
    %349 = vmatmul.mubr.bf16.gmra.mrb[0].mxu0 %v234
    %v350 = vpop.f32.mrb[0].mxu0
    %v351 = vadd.f32 0.0, %v350
    %v352 = vpop.f32.mrb[0].mxu0
    %v353 = vpop.f32.mrb[0].mxu0
    %v354 = vadd.f32 0.0, %v353
    %v355 = vpop.f32.mrb[0].mxu0
    %356 = vmatprep.mubr.bf16.mxu0 0
    %357 = vmatmul.mubr.bf16.gmra.mrb[0].mxu0 %v237
    %v358 = vpop.f32.mrb[0].mxu0
    %v359 = vadd.f32 0.0, %v358
    %v360 = vpop.f32.mrb[0].mxu0
    %v361 = vpop.f32.mrb[0].mxu0
    %v362 = vadd.f32 0.0, %v361
    %v363 = vpop.f32.mrb[0].mxu0
    %364 = vmatprep.mubr.bf16.mxu0 0
    %365 = vmatmul.mubr.bf16.gmra.mrb[0].mxu0 %v240
    %v366 = vpop.f32.mrb[0].mxu0
    %v367 = vadd.f32 0.0, %v366
    %v368 = vpop.f32.mrb[0].mxu0
    %v369 = vpop.f32.mrb[0].mxu0
    %v370 = vadd.f32 0.0, %v369
    %v371 = vpop.f32.mrb[0].mxu0
    %372 = vmatprep.mubr.bf16.mxu0 0
    %373 = vmatmul.mubr.bf16.gmra.mrb[0].mxu0 %v243
    %v374 = vpop.f32.mrb[0].mxu0
    %v375 = vadd.f32 0.0, %v374
    %v376 = vpop.f32.mrb[0].mxu0
    %v377 = vpop.f32.mrb[0].mxu0
    %v378 = vadd.f32 0.0, %v377
    %v379 = vpop.f32.mrb[0].mxu0
    %380 = vmatprep.mubr.bf16.mxu0 0
    %381 = vmatmul.mubr.bf16.gmra.mrb[0].mxu0 %v246
    %v382 = vpop.f32.mrb[0].mxu0
    %v383 = vadd.f32 0.0, %v382
    %v384 = vpop.f32.mrb[0].mxu0
    %v385 = vpop.f32.mrb[0].mxu0
    %v386 = vadd.f32 0.0, %v385
    %v387 = vpop.f32.mrb[0].mxu0
    %388 = vmatprep.mubr.bf16.mxu0 0
    %389 = vmatmul.mubr.bf16.gmra.mrb[0].mxu0 %v249
    %v390 = vpop.f32.mrb[0].mxu0
    %v391 = vadd.f32 0.0, %v390
    %v392 = vpop.f32.mrb[0].mxu0
    %v393 = vpop.f32.mrb[0].mxu0
    %v394 = vadd.f32 0.0, %v393
    %v395 = vpop.f32.mrb[0].mxu0
    %396 = vmatprep.mubr.bf16.mxu0 0
    %397 = vmatmul.mubr.bf16.gmra.mrb[0].mxu0 %v252
    %v398 = vpop.f32.mrb[0].mxu0
    %v399 = vadd.f32 0.0, %v398
    %v400 = vpop.f32.mrb[0].mxu0
    %v401 = vpop.f32.mrb[0].mxu0
    %v402 = vadd.f32 0.0, %v401
    %v403 = vpop.f32.mrb[0].mxu0
    %404 = vmatprep.mubr.bf16.mxu0 0
    %405 = vmatmul.mubr.bf16.gmra.mrb[0].mxu0 %v255
    %v406 = vpop.f32.mrb[0].mxu0
    %v407 = vadd.f32 0.0, %v406
    %v408 = vpop.f32.mrb[0].mxu0
    %v409 = vpop.f32.mrb[0].mxu0
    %v410 = vadd.f32 0.0, %v409
    %v411 = vpop.f32.mrb[0].mxu0
    %412 = vmatprep.mubr.bf16.mxu0 0
    %413 = vmatmul.mubr.bf16.gmra.mrb[0].mxu0 %v258
    %v414 = vpop.f32.mrb[0].mxu0
    %v415 = vadd.f32 0.0, %v414
    %v416 = vpop.f32.mrb[0].mxu0
    %v417 = vpop.f32.mrb[0].mxu0
    %v418 = vadd.f32 0.0, %v417
    %v419 = vpop.f32.mrb[0].mxu0
    %420 = vdwg.mxu0
    %v421 = vpack.c.bf16 %v298, %v295
    %v422 = vpack.c.bf16 %v306, %v303
    %v423 = vpack.c.bf16 %v314, %v311
    %v424 = vpack.c.bf16 %v322, %v319
    %v425 = vpack.c.bf16 %v330, %v327
    %v426 = vpack.c.bf16 %v338, %v335
    %v427 = vpack.c.bf16 %v346, %v343
    %v428 = vpack.c.bf16 %v354, %v351
    %v429 = vpack.c.bf16 %v362, %v359
    %v430 = vpack.c.bf16 %v370, %v367
    %v431 = vpack.c.bf16 %v378, %v375
    %v432 = vpack.c.bf16 %v386, %v383
    %v433 = vpack.c.bf16 %v394, %v391
    %v434 = vpack.c.bf16 %v402, %v399
    %v435 = vpack.c.bf16 %v410, %v407
    %v436 = vpack.c.bf16 %v418, %v415
    %v469 = vunpack.c.l.b16 %v42
    %v470 = vunpack.c.h.b16 %v42
    %v471 = vunpack.c.l.b16 %v43
    %v472 = vunpack.c.h.b16 %v43
    %v473 = vunpack.c.l.b16 %v44
    %v474 = vunpack.c.h.b16 %v44
    %v475 = vunpack.c.l.b16 %v45
    %v476 = vunpack.c.h.b16 %v45
    %v477 = vunpack.c.l.b16 %v46
    %v478 = vunpack.c.h.b16 %v46
    %v479 = vunpack.c.l.b16 %v47
    %v480 = vunpack.c.h.b16 %v47
    %v481 = vunpack.c.l.b16 %v48
    %v482 = vunpack.c.h.b16 %v48
    %v483 = vunpack.c.l.b16 %v49
    %v484 = vunpack.c.h.b16 %v49
    %v485 = vunpack.c.l.b16 %v50
    %v486 = vunpack.c.h.b16 %v50
    %v487 = vunpack.c.l.b16 %v51
    %v488 = vunpack.c.h.b16 %v51
    %v489 = vunpack.c.l.b16 %v52
    %v490 = vunpack.c.h.b16 %v52
    %v491 = vunpack.c.l.b16 %v53
    %v492 = vunpack.c.h.b16 %v53
    %v493 = vunpack.c.l.b16 %v54
    %v494 = vunpack.c.h.b16 %v54
    %v495 = vunpack.c.l.b16 %v55
    %v496 = vunpack.c.h.b16 %v55
    %v497 = vunpack.c.l.b16 %v56
    %v498 = vunpack.c.h.b16 %v56
    %v499 = vunpack.c.l.b16 %v57
    %v500 = vunpack.c.h.b16 %v57
    %v501 = vunpack.c.l.b16 %v58
    %v502 = vunpack.c.h.b16 %v58
    %v503 = vunpack.c.l.b16 %v59
    %v504 = vunpack.c.h.b16 %v59
    %v505 = vunpack.c.l.b16 %v60
    %v506 = vunpack.c.h.b16 %v60
    %v507 = vunpack.c.l.b16 %v61
    %v508 = vunpack.c.h.b16 %v61
    %v509 = vunpack.c.l.b16 %v62
    %v510 = vunpack.c.h.b16 %v62
    %v511 = vunpack.c.l.b16 %v63
    %v512 = vunpack.c.h.b16 %v63
    %v513 = vunpack.c.l.b16 %v64
    %v514 = vunpack.c.h.b16 %v64
    %v515 = vunpack.c.l.b16 %v65
    %v516 = vunpack.c.h.b16 %v65
    %v517 = vunpack.c.l.b16 %v66
    %v518 = vunpack.c.h.b16 %v66
    %v519 = vunpack.c.l.b16 %v67
    %v520 = vunpack.c.h.b16 %v67
    %v521 = vunpack.c.l.b16 %v68
    %v522 = vunpack.c.h.b16 %v68
    %v523 = vunpack.c.l.b16 %v69
    %v524 = vunpack.c.h.b16 %v69
    %v525 = vunpack.c.l.b16 %v70
    %v526 = vunpack.c.h.b16 %v70
    %v527 = vunpack.c.l.b16 %v71
    %v528 = vunpack.c.h.b16 %v71
    %v529 = vunpack.c.l.b16 %v72
    %v530 = vunpack.c.h.b16 %v72
    %v531 = vunpack.c.l.b16 %v73
    %v532 = vunpack.c.h.b16 %v73
    %v533 = vpack.c.b16 %v471, %v469
    %v534 = vpack.c.b16 %v472, %v470
    %v535 = vpack.c.b16 %v475, %v473
    %v536 = vpack.c.b16 %v476, %v474
    %v537 = vpack.c.b16 %v479, %v477
    %v538 = vpack.c.b16 %v480, %v478
    %v539 = vpack.c.b16 %v483, %v481
    %v540 = vpack.c.b16 %v484, %v482
    %v541 = vpack.c.b16 %v487, %v485
    %v542 = vpack.c.b16 %v488, %v486
    %v543 = vpack.c.b16 %v491, %v489
    %v544 = vpack.c.b16 %v492, %v490
    %v545 = vpack.c.b16 %v495, %v493
    %v546 = vpack.c.b16 %v496, %v494
    %v547 = vpack.c.b16 %v499, %v497
    %v548 = vpack.c.b16 %v500, %v498
    %v549 = vpack.c.b16 %v503, %v501
    %v550 = vpack.c.b16 %v504, %v502
    %v551 = vpack.c.b16 %v507, %v505
    %v552 = vpack.c.b16 %v508, %v506
    %v553 = vpack.c.b16 %v511, %v509
    %v554 = vpack.c.b16 %v512, %v510
    %v555 = vpack.c.b16 %v515, %v513
    %v556 = vpack.c.b16 %v516, %v514
    %v557 = vpack.c.b16 %v519, %v517
    %v558 = vpack.c.b16 %v520, %v518
    %v559 = vpack.c.b16 %v523, %v521
    %v560 = vpack.c.b16 %v524, %v522
    %v561 = vpack.c.b16 %v527, %v525
    %v562 = vpack.c.b16 %v528, %v526
    %v563 = vpack.c.b16 %v531, %v529
    %v564 = vpack.c.b16 %v532, %v530
    %629 = vrot.lane.b32.xlu0 %v295, 64
    %v630 = vpop.permute.xlu0 %629
    %631 = vrot.lane.b32.xlu0 %v298, 64
    %v632 = vpop.permute.xlu0 %631
    %633 = vrot.lane.b32.xlu0 %v303, 64
    %v634 = vpop.permute.xlu0 %633
    %635 = vrot.lane.b32.xlu0 %v306, 64
    %v636 = vpop.permute.xlu0 %635
    %637 = vrot.lane.b32.xlu0 %v311, 64
    %v638 = vpop.permute.xlu0 %637
    %639 = vrot.lane.b32.xlu0 %v314, 64
    %v640 = vpop.permute.xlu0 %639
    %641 = vrot.lane.b32.xlu0 %v319, 64
    %v642 = vpop.permute.xlu0 %641
    %643 = vrot.lane.b32.xlu0 %v322, 64
    %v644 = vpop.permute.xlu0 %643
    %645 = vrot.lane.b32.xlu0 %v327, 64
    %v646 = vpop.permute.xlu0 %645
    %647 = vrot.lane.b32.xlu0 %v330, 64
    %v648 = vpop.permute.xlu0 %647
    %649 = vrot.lane.b32.xlu0 %v335, 64
    %v650 = vpop.permute.xlu0 %649
    %651 = vrot.lane.b32.xlu0 %v338, 64
    %v652 = vpop.permute.xlu0 %651
    %653 = vrot.lane.b32.xlu0 %v343, 64
    %v654 = vpop.permute.xlu0 %653
    %655 = vrot.lane.b32.xlu0 %v346, 64
    %v656 = vpop.permute.xlu0 %655
    %657 = vrot.lane.b32.xlu0 %v351, 64
    %v658 = vpop.permute.xlu0 %657
    %659 = vrot.lane.b32.xlu0 %v354, 64
    %v660 = vpop.permute.xlu0 %659
    %661 = vrot.lane.b32.xlu0 %v359, 64
    %v662 = vpop.permute.xlu0 %661
    %663 = vrot.lane.b32.xlu0 %v362, 64
    %v664 = vpop.permute.xlu0 %663
    %665 = vrot.lane.b32.xlu0 %v367, 64
    %v666 = vpop.permute.xlu0 %665
    %667 = vrot.lane.b32.xlu0 %v370, 64
    %v668 = vpop.permute.xlu0 %667
    %669 = vrot.lane.b32.xlu0 %v375, 64
    %v670 = vpop.permute.xlu0 %669
    %671 = vrot.lane.b32.xlu0 %v378, 64
    %v672 = vpop.permute.xlu0 %671
    %673 = vrot.lane.b32.xlu0 %v383, 64
    %v674 = vpop.permute.xlu0 %673
    %675 = vrot.lane.b32.xlu0 %v386, 64
    %v676 = vpop.permute.xlu0 %675
    %677 = vrot.lane.b32.xlu0 %v391, 64
    %v678 = vpop.permute.xlu0 %677
    %679 = vrot.lane.b32.xlu0 %v394, 64
    %v680 = vpop.permute.xlu0 %679
    %681 = vrot.lane.b32.xlu0 %v399, 64
    %v682 = vpop.permute.xlu0 %681
    %683 = vrot.lane.b32.xlu0 %v402, 64
    %v684 = vpop.permute.xlu0 %683
    %685 = vrot.lane.b32.xlu0 %v407, 64
    %v686 = vpop.permute.xlu0 %685
    %687 = vrot.lane.b32.xlu0 %v410, 64
    %v688 = vpop.permute.xlu0 %687
    %689 = vrot.lane.b32.xlu0 %v415, 64
    %v690 = vpop.permute.xlu0 %689
    %691 = vrot.lane.b32.xlu0 %v418, 64
    %v692 = vpop.permute.xlu0 %691
    %725 = vmatprep.subr.bf16.mxu0 0
    %726 = vmatpush1.bf16.msra.mxu0 %v421
    %727 = vmatprep.subr.bf16.mxu0 0
    %728 = vmatpush1.bf16.msra.mxu0 %v422
    %729 = vmatprep.subr.bf16.mxu0 0
    %730 = vmatpush1.bf16.msra.mxu0 %v423
    %731 = vmatprep.subr.bf16.mxu0 0
    %732 = vmatpush1.bf16.msra.mxu0 %v424
    %733 = vmatprep.subr.bf16.mxu0 0
    %734 = vmatpush1.bf16.msra.mxu0 %v425
    %735 = vmatprep.subr.bf16.mxu0 0
    %736 = vmatpush1.bf16.msra.mxu0 %v426
    %737 = vmatprep.subr.bf16.mxu0 0
    %738 = vmatpush1.bf16.msra.mxu0 %v427
    %739 = vmatprep.subr.bf16.mxu0 0
    %740 = vmatpush1.bf16.msra.mxu0 %v428
    %741 = vmatprep.subr.bf16.mxu0 0
    %742 = vmatpush1.bf16.msra.mxu0 %v429
    %743 = vmatprep.subr.bf16.mxu0 0
    %744 = vmatpush1.bf16.msra.mxu0 %v430
    %745 = vmatprep.subr.bf16.mxu0 0
    %746 = vmatpush1.bf16.msra.mxu0 %v431
    %747 = vmatprep.subr.bf16.mxu0 0
    %748 = vmatpush1.bf16.msra.mxu0 %v432
    %749 = vmatprep.subr.bf16.mxu0 0
    %750 = vmatpush1.bf16.msra.mxu0 %v433
    %751 = vmatprep.subr.bf16.mxu0 0
    %752 = vmatpush1.bf16.msra.mxu0 %v434
    %753 = vmatprep.subr.bf16.mxu0 0
    %754 = vmatpush1.bf16.msra.mxu0 %v435
    %755 = vmatprep.subr.bf16.mxu0 0
    %756 = vmatpush1.bf16.msra.mxu0 %v436
    %757 = vmatprep.mubr.bf16.mxu0 %v534
    %758 = vmatmul.mubr.bf16.gmra.mrb[0].mxu0 %v533
    %v759 = vpop.f32.mrb[0].mxu0
    %v760 = vadd.f32 %v630, %v759
    %v761 = vpop.f32.mrb[0].mxu0
    %v762 = vpop.f32.mrb[0].mxu0
    %v763 = vadd.f32 %v632, %v762
    %v764 = vpop.f32.mrb[0].mxu0
    %765 = vmatprep.mubr.bf16.mxu0 %v536
    %766 = vmatmul.mubr.bf16.gmra.mrb[0].mxu0 %v535
    %v767 = vpop.f32.mrb[0].mxu0
    %v768 = vadd.f32 %v634, %v767
    %v769 = vpop.f32.mrb[0].mxu0
    %v770 = vpop.f32.mrb[0].mxu0
    %v771 = vadd.f32 %v636, %v770
    %v772 = vpop.f32.mrb[0].mxu0
    %773 = vmatprep.mubr.bf16.mxu0 %v538
    %774 = vmatmul.mubr.bf16.gmra.mrb[0].mxu0 %v537
    %v775 = vpop.f32.mrb[0].mxu0
    %v776 = vadd.f32 %v638, %v775
    %v777 = vpop.f32.mrb[0].mxu0
    %v778 = vpop.f32.mrb[0].mxu0
    %v779 = vadd.f32 %v640, %v778
    %v780 = vpop.f32.mrb[0].mxu0
    %781 = vmatprep.mubr.bf16.mxu0 %v540
    %782 = vmatmul.mubr.bf16.gmra.mrb[0].mxu0 %v539
    %v783 = vpop.f32.mrb[0].mxu0
    %v784 = vadd.f32 %v642, %v783
    %v785 = vpop.f32.mrb[0].mxu0
    %v786 = vpop.f32.mrb[0].mxu0
    %v787 = vadd.f32 %v644, %v786
    %v788 = vpop.f32.mrb[0].mxu0
    %789 = vmatprep.mubr.bf16.mxu0 %v542
    %790 = vmatmul.mubr.bf16.gmra.mrb[0].mxu0 %v541
    %v791 = vpop.f32.mrb[0].mxu0
    %v792 = vadd.f32 %v646, %v791
    %v793 = vpop.f32.mrb[0].mxu0
    %v794 = vpop.f32.mrb[0].mxu0
    %v795 = vadd.f32 %v648, %v794
    %v796 = vpop.f32.mrb[0].mxu0
    %797 = vmatprep.mubr.bf16.mxu0 %v544
    %798 = vmatmul.mubr.bf16.gmra.mrb[0].mxu0 %v543
    %v799 = vpop.f32.mrb[0].mxu0
    %v800 = vadd.f32 %v650, %v799
    %v801 = vpop.f32.mrb[0].mxu0
    %v802 = vpop.f32.mrb[0].mxu0
    %v803 = vadd.f32 %v652, %v802
    %v804 = vpop.f32.mrb[0].mxu0
    %805 = vmatprep.mubr.bf16.mxu0 %v546
    %806 = vmatmul.mubr.bf16.gmra.mrb[0].mxu0 %v545
    %v807 = vpop.f32.mrb[0].mxu0
    %v808 = vadd.f32 %v654, %v807
    %v809 = vpop.f32.mrb[0].mxu0
    %v810 = vpop.f32.mrb[0].mxu0
    %v811 = vadd.f32 %v656, %v810
    %v812 = vpop.f32.mrb[0].mxu0
    %813 = vmatprep.mubr.bf16.mxu0 %v548
    %814 = vmatmul.mubr.bf16.gmra.mrb[0].mxu0 %v547
    %v815 = vpop.f32.mrb[0].mxu0
    %v816 = vadd.f32 %v658, %v815
    %v817 = vpop.f32.mrb[0].mxu0
    %v818 = vpop.f32.mrb[0].mxu0
    %v819 = vadd.f32 %v660, %v818
    %v820 = vpop.f32.mrb[0].mxu0
    %821 = vmatprep.mubr.bf16.mxu0 %v550
    %822 = vmatmul.mubr.bf16.gmra.mrb[0].mxu0 %v549
    %v823 = vpop.f32.mrb[0].mxu0
    %v824 = vadd.f32 %v662, %v823
    %v825 = vpop.f32.mrb[0].mxu0
    %v826 = vpop.f32.mrb[0].mxu0
    %v827 = vadd.f32 %v664, %v826
    %v828 = vpop.f32.mrb[0].mxu0
    %829 = vmatprep.mubr.bf16.mxu0 %v552
    %830 = vmatmul.mubr.bf16.gmra.mrb[0].mxu0 %v551
    %v831 = vpop.f32.mrb[0].mxu0
    %v832 = vadd.f32 %v666, %v831
    %v833 = vpop.f32.mrb[0].mxu0
    %v834 = vpop.f32.mrb[0].mxu0
    %v835 = vadd.f32 %v668, %v834
    %v836 = vpop.f32.mrb[0].mxu0
    %837 = vmatprep.mubr.bf16.mxu0 %v554
    %838 = vmatmul.mubr.bf16.gmra.mrb[0].mxu0 %v553
    %v839 = vpop.f32.mrb[0].mxu0
    %v840 = vadd.f32 %v670, %v839
    %v841 = vpop.f32.mrb[0].mxu0
    %v842 = vpop.f32.mrb[0].mxu0
    %v843 = vadd.f32 %v672, %v842
    %v844 = vpop.f32.mrb[0].mxu0
    %845 = vmatprep.mubr.bf16.mxu0 %v556
    %846 = vmatmul.mubr.bf16.gmra.mrb[0].mxu0 %v555
    %v847 = vpop.f32.mrb[0].mxu0
    %v848 = vadd.f32 %v674, %v847
    %v849 = vpop.f32.mrb[0].mxu0
    %v850 = vpop.f32.mrb[0].mxu0
    %v851 = vadd.f32 %v676, %v850
    %v852 = vpop.f32.mrb[0].mxu0
    %853 = vmatprep.mubr.bf16.mxu0 %v558
    %854 = vmatmul.mubr.bf16.gmra.mrb[0].mxu0 %v557
    %v855 = vpop.f32.mrb[0].mxu0
    %v856 = vadd.f32 %v678, %v855
    %v857 = vpop.f32.mrb[0].mxu0
    %v858 = vpop.f32.mrb[0].mxu0
    %v859 = vadd.f32 %v680, %v858
    %v860 = vpop.f32.mrb[0].mxu0
    %861 = vmatprep.mubr.bf16.mxu0 %v560
    %862 = vmatmul.mubr.bf16.gmra.mrb[0].mxu0 %v559
    %v863 = vpop.f32.mrb[0].mxu0
    %v864 = vadd.f32 %v682, %v863
    %v865 = vpop.f32.mrb[0].mxu0
    %v866 = vpop.f32.mrb[0].mxu0
    %v867 = vadd.f32 %v684, %v866
    %v868 = vpop.f32.mrb[0].mxu0
    %869 = vmatprep.mubr.bf16.mxu0 %v562
    %870 = vmatmul.mubr.bf16.gmra.mrb[0].mxu0 %v561
    %v871 = vpop.f32.mrb[0].mxu0
    %v872 = vadd.f32 %v686, %v871
    %v873 = vpop.f32.mrb[0].mxu0
    %v874 = vpop.f32.mrb[0].mxu0
    %v875 = vadd.f32 %v688, %v874
    %v876 = vpop.f32.mrb[0].mxu0
    %877 = vmatprep.mubr.bf16.mxu0 %v564
    %878 = vmatmul.mubr.bf16.gmra.mrb[0].mxu0 %v563
    %v879 = vpop.f32.mrb[0].mxu0
    %v880 = vadd.f32 %v690, %v879
    %v881 = vpop.f32.mrb[0].mxu0
    %v882 = vpop.f32.mrb[0].mxu0
    %v883 = vadd.f32 %v692, %v882
    %v884 = vpop.f32.mrb[0].mxu0
    %885 = vdwg.mxu0
    %v886 = vlaneseq
    %v887 = vshrl.u32 %v886, 7
    %v888 = vsub.s32 0, %v887
    %v889 = vrot.slane %v106, %v888
    %v890 = vadd.f32 %v760, %v889
    %v891 = vadd.f32 %v763, %v889
    %v892 = vadd.f32 %v768, %v889
    %v893 = vadd.f32 %v771, %v889
    %v894 = vadd.f32 %v776, %v889
    %v895 = vadd.f32 %v779, %v889
    %v896 = vadd.f32 %v784, %v889
    %v897 = vadd.f32 %v787, %v889
    %v898 = vadd.f32 %v792, %v889
    %v899 = vadd.f32 %v795, %v889
    %v900 = vadd.f32 %v800, %v889
    %v901 = vadd.f32 %v803, %v889
    %v902 = vadd.f32 %v808, %v889
    %v903 = vadd.f32 %v811, %v889
    %v904 = vadd.f32 %v816, %v889
    %v905 = vadd.f32 %v819, %v889
    %v906 = vadd.f32 %v824, %v889
    %v907 = vadd.f32 %v827, %v889
    %v908 = vadd.f32 %v832, %v889
    %v909 = vadd.f32 %v835, %v889
    %v910 = vadd.f32 %v840, %v889
    %v911 = vadd.f32 %v843, %v889
    %v912 = vadd.f32 %v848, %v889
    %v913 = vadd.f32 %v851, %v889
    %v914 = vadd.f32 %v856, %v889
    %v915 = vadd.f32 %v859, %v889
    %v916 = vadd.f32 %v864, %v889
    %v917 = vadd.f32 %v867, %v889
    %v918 = vadd.f32 %v872, %v889
    %v919 = vadd.f32 %v875, %v889
    %v920 = vadd.f32 %v880, %v889
    %v921 = vadd.f32 %v883, %v889
    %v922 = vmax.f32 %v890, 0.0
    %v923 = vmax.f32 %v891, 0.0
    %v924 = vmax.f32 %v892, 0.0
    %v925 = vmax.f32 %v893, 0.0
    %v926 = vmax.f32 %v894, 0.0
    %v927 = vmax.f32 %v895, 0.0
    %v928 = vmax.f32 %v896, 0.0
    %v929 = vmax.f32 %v897, 0.0
    %v930 = vmax.f32 %v898, 0.0
    %v931 = vmax.f32 %v899, 0.0
    %v932 = vmax.f32 %v900, 0.0
    %v933 = vmax.f32 %v901, 0.0
    %v934 = vmax.f32 %v902, 0.0
    %v935 = vmax.f32 %v903, 0.0
    %v936 = vmax.f32 %v904, 0.0
    %v937 = vmax.f32 %v905, 0.0
    %v938 = vmax.f32 %v906, 0.0
    %v939 = vmax.f32 %v907, 0.0
    %v940 = vmax.f32 %v908, 0.0
    %v941 = vmax.f32 %v909, 0.0
    %v942 = vmax.f32 %v910, 0.0
    %v943 = vmax.f32 %v911, 0.0
    %v944 = vmax.f32 %v912, 0.0
    %v945 = vmax.f32 %v913, 0.0
    %v946 = vmax.f32 %v914, 0.0
    %v947 = vmax.f32 %v915, 0.0
    %v948 = vmax.f32 %v916, 0.0
    %v949 = vmax.f32 %v917, 0.0
    %v950 = vmax.f32 %v918, 0.0
    %v951 = vmax.f32 %v919, 0.0
    %v952 = vmax.f32 %v920, 0.0
    %v953 = vmax.f32 %v921, 0.0
    %v954 = vpack.c.bf16 %v923, %v922
    %v955 = vpack.c.bf16 %v925, %v924
    %v956 = vpack.c.bf16 %v927, %v926
    %v957 = vpack.c.bf16 %v929, %v928
    %v958 = vpack.c.bf16 %v931, %v930
    %v959 = vpack.c.bf16 %v933, %v932
    %v960 = vpack.c.bf16 %v935, %v934
    %v961 = vpack.c.bf16 %v937, %v936
    %v962 = vpack.c.bf16 %v939, %v938
    %v963 = vpack.c.bf16 %v941, %v940
    %v964 = vpack.c.bf16 %v943, %v942
    %v965 = vpack.c.bf16 %v945, %v944
    %v966 = vpack.c.bf16 %v947, %v946
    %v967 = vpack.c.bf16 %v949, %v948
    %v968 = vpack.c.bf16 %v951, %v950
    %v969 = vpack.c.bf16 %v953, %v952
    %v970 = vld [vmem:[%s4] sm:$0xf]
    %v971 = vld [vmem:[%s4 + $0x4] sm:$0xf]
    %v972 = vld [vmem:[%s4 + $0x8] sm:$0xf]
    %v973 = vld [vmem:[%s4 + $0xc] sm:$0xf]
    %v974 = vld [vmem:[%s4 + $0x10] sm:$0xf]
    %v975 = vld [vmem:[%s4 + $0x14] sm:$0xf]
    %v976 = vld [vmem:[%s4 + $0x18] sm:$0xf]
    %v977 = vld [vmem:[%s4 + $0x1c] sm:$0xf]
    %v986 = vunpack.c.l.b16 %v970
    %v987 = vunpack.c.l.b16 %v971
    %v988 = vunpack.c.l.b16 %v972
    %v989 = vunpack.c.l.b16 %v973
    %v990 = vunpack.c.l.b16 %v974
    %v991 = vunpack.c.l.b16 %v975
    %v992 = vunpack.c.l.b16 %v976
    %v993 = vunpack.c.l.b16 %v977
    %v994 = vpack.c.b16 %v987, %v986
    %v995 = vpack.c.b16 %v989, %v988
    %v996 = vpack.c.b16 %v991, %v990
    %v997 = vpack.c.b16 %v993, %v992
    %vm1002 = vcmask 523264
    %v1004 = vsel %vm1002, %v954, 0
    %v1007 = vsel %vm1002, %v955, 0
    %v1010 = vsel %vm1002, %v956, 0
    %v1013 = vsel %vm1002, %v957, 0
    %v1016 = vsel %vm1002, %v958, 0
    %v1019 = vsel %vm1002, %v959, 0
    %v1022 = vsel %vm1002, %v960, 0
    %v1025 = vsel %vm1002, %v961, 0
    %v1028 = vsel %vm1002, %v962, 0
    %v1031 = vsel %vm1002, %v963, 0
    %v1034 = vsel %vm1002, %v964, 0
    %v1037 = vsel %vm1002, %v965, 0
    %v1040 = vsel %vm1002, %v966, 0
    %v1043 = vsel %vm1002, %v967, 0
    %v1046 = vsel %vm1002, %v968, 0
    %v1049 = vsel %vm1002, %v969, 0
    %1051 = vmatprep.subr.bf16.mxu0 0
    %1052 = vmatpush1.bf16.msra.mxu0 %v994
    %1053 = vmatprep.subr.bf16.mxu0 0
    %1054 = vmatpush1.bf16.msra.mxu0 %v995
    %1055 = vmatprep.subr.bf16.mxu0 0
    %1056 = vmatpush1.bf16.msra.mxu0 %v996
    %1057 = vmatprep.subr.bf16.mxu0 0
    %1058 = vmatpush1.bf16.msra.mxu0 %v997
    %1059 = vmatprep.subr.bf16.mxu0 0
    %1060 = vmatpush1.bf16.msra.mxu0 0
    %1061 = vmatprep.subr.bf16.mxu0 0
    %1062 = vmatpush1.bf16.msra.mxu0 0
    %1063 = vmatprep.subr.bf16.mxu0 0
    %1064 = vmatpush1.bf16.msra.mxu0 0
    %1065 = vmatprep.subr.bf16.mxu0 0
    %1066 = vmatpush1.bf16.msra.mxu0 0
    %1067 = vmatprep.subr.bf16.mxu0 0
    %1068 = vmatpush1.bf16.msra.mxu0 0
    %1069 = vmatprep.subr.bf16.mxu0 0
    %1070 = vmatpush1.bf16.msra.mxu0 0
    %1071 = vmatprep.subr.bf16.mxu0 0
    %1072 = vmatpush1.bf16.msra.mxu0 0
    %1073 = vmatprep.subr.bf16.mxu0 0
    %1074 = vmatpush1.bf16.msra.mxu0 0
    %1075 = vmatprep.subr.bf16.mxu0 0
    %1076 = vmatpush1.bf16.msra.mxu0 0
    %1077 = vmatprep.subr.bf16.mxu0 0
    %1078 = vmatpush1.bf16.msra.mxu0 0
    %1079 = vmatprep.subr.bf16.mxu0 0
    %1080 = vmatpush1.bf16.msra.mxu0 0
    %1081 = vmatprep.subr.bf16.mxu0 0
    %1082 = vmatpush1.bf16.msra.mxu0 0
    %1083 = vmatprep.mubr.bf16.mxu0 0
    %1084 = vmatmul.mubr.bf16.gmra.mrb[0].mxu0 %v1004
    %v1085 = vpop.f32.mrb[0].mxu0
    %v1086 = vadd.f32 0.0, %v1085
    %v1087 = vpop.f32.mrb[0].mxu0
    %v1088 = vpop.f32.mrb[0].mxu0
    %v1089 = vadd.f32 0.0, %v1088
    %v1090 = vpop.f32.mrb[0].mxu0
    %1091 = vmatprep.mubr.bf16.mxu0 0
    %1092 = vmatmul.mubr.bf16.gmra.mrb[0].mxu0 %v1007
    %v1093 = vpop.f32.mrb[0].mxu0
    %v1094 = vadd.f32 0.0, %v1093
    %v1095 = vpop.f32.mrb[0].mxu0
    %v1096 = vpop.f32.mrb[0].mxu0
    %v1097 = vadd.f32 0.0, %v1096
    %v1098 = vpop.f32.mrb[0].mxu0
    %1099 = vmatprep.mubr.bf16.mxu0 0
    %1100 = vmatmul.mubr.bf16.gmra.mrb[0].mxu0 %v1010
    %v1101 = vpop.f32.mrb[0].mxu0
    %v1102 = vadd.f32 0.0, %v1101
    %v1103 = vpop.f32.mrb[0].mxu0
    %v1104 = vpop.f32.mrb[0].mxu0
    %v1105 = vadd.f32 0.0, %v1104
    %v1106 = vpop.f32.mrb[0].mxu0
    %1107 = vmatprep.mubr.bf16.mxu0 0
    %1108 = vmatmul.mubr.bf16.gmra.mrb[0].mxu0 %v1013
    %v1109 = vpop.f32.mrb[0].mxu0
    %v1110 = vadd.f32 0.0, %v1109
    %v1111 = vpop.f32.mrb[0].mxu0
    %v1112 = vpop.f32.mrb[0].mxu0
    %v1113 = vadd.f32 0.0, %v1112
    %v1114 = vpop.f32.mrb[0].mxu0
    %1115 = vmatprep.mubr.bf16.mxu0 0
    %1116 = vmatmul.mubr.bf16.gmra.mrb[0].mxu0 %v1016
    %v1117 = vpop.f32.mrb[0].mxu0
    %v1118 = vadd.f32 0.0, %v1117
    %v1119 = vpop.f32.mrb[0].mxu0
    %v1120 = vpop.f32.mrb[0].mxu0
    %v1121 = vadd.f32 0.0, %v1120
    %v1122 = vpop.f32.mrb[0].mxu0
    %1123 = vmatprep.mubr.bf16.mxu0 0
    %1124 = vmatmul.mubr.bf16.gmra.mrb[0].mxu0 %v1019
    %v1125 = vpop.f32.mrb[0].mxu0
    %v1126 = vadd.f32 0.0, %v1125
    %v1127 = vpop.f32.mrb[0].mxu0
    %v1128 = vpop.f32.mrb[0].mxu0
    %v1129 = vadd.f32 0.0, %v1128
    %v1130 = vpop.f32.mrb[0].mxu0
    %1131 = vmatprep.mubr.bf16.mxu0 0
    %1132 = vmatmul.mubr.bf16.gmra.mrb[0].mxu0 %v1022
    %v1133 = vpop.f32.mrb[0].mxu0
    %v1134 = vadd.f32 0.0, %v1133
    %v1135 = vpop.f32.mrb[0].mxu0
    %v1136 = vpop.f32.mrb[0].mxu0
    %v1137 = vadd.f32 0.0, %v1136
    %v1138 = vpop.f32.mrb[0].mxu0
    %1139 = vmatprep.mubr.bf16.mxu0 0
    %1140 = vmatmul.mubr.bf16.gmra.mrb[0].mxu0 %v1025
    %v1141 = vpop.f32.mrb[0].mxu0
    %v1142 = vadd.f32 0.0, %v1141
    %v1143 = vpop.f32.mrb[0].mxu0
    %v1144 = vpop.f32.mrb[0].mxu0
    %v1145 = vadd.f32 0.0, %v1144
    %v1146 = vpop.f32.mrb[0].mxu0
    %1147 = vmatprep.mubr.bf16.mxu0 0
    %1148 = vmatmul.mubr.bf16.gmra.mrb[0].mxu0 %v1028
    %v1149 = vpop.f32.mrb[0].mxu0
    %v1150 = vadd.f32 0.0, %v1149
    %v1151 = vpop.f32.mrb[0].mxu0
    %v1152 = vpop.f32.mrb[0].mxu0
    %v1153 = vadd.f32 0.0, %v1152
    %v1154 = vpop.f32.mrb[0].mxu0
    %1155 = vmatprep.mubr.bf16.mxu0 0
    %1156 = vmatmul.mubr.bf16.gmra.mrb[0].mxu0 %v1031
    %v1157 = vpop.f32.mrb[0].mxu0
    %v1158 = vadd.f32 0.0, %v1157
    %v1159 = vpop.f32.mrb[0].mxu0
    %v1160 = vpop.f32.mrb[0].mxu0
    %v1161 = vadd.f32 0.0, %v1160
    %v1162 = vpop.f32.mrb[0].mxu0
    %1163 = vmatprep.mubr.bf16.mxu0 0
    %1164 = vmatmul.mubr.bf16.gmra.mrb[0].mxu0 %v1034
    %v1165 = vpop.f32.mrb[0].mxu0
    %v1166 = vadd.f32 0.0, %v1165
    %v1167 = vpop.f32.mrb[0].mxu0
    %v1168 = vpop.f32.mrb[0].mxu0
    %v1169 = vadd.f32 0.0, %v1168
    %v1170 = vpop.f32.mrb[0].mxu0
    %1171 = vmatprep.mubr.bf16.mxu0 0
    %1172 = vmatmul.mubr.bf16.gmra.mrb[0].mxu0 %v1037
    %v1173 = vpop.f32.mrb[0].mxu0
    %v1174 = vadd.f32 0.0, %v1173
    %v1175 = vpop.f32.mrb[0].mxu0
    %v1176 = vpop.f32.mrb[0].mxu0
    %v1177 = vadd.f32 0.0, %v1176
    %v1178 = vpop.f32.mrb[0].mxu0
    %1179 = vmatprep.mubr.bf16.mxu0 0
    %1180 = vmatmul.mubr.bf16.gmra.mrb[0].mxu0 %v1040
    %v1181 = vpop.f32.mrb[0].mxu0
    %v1182 = vadd.f32 0.0, %v1181
    %v1183 = vpop.f32.mrb[0].mxu0
    %v1184 = vpop.f32.mrb[0].mxu0
    %v1185 = vadd.f32 0.0, %v1184
    %v1186 = vpop.f32.mrb[0].mxu0
    %1187 = vmatprep.mubr.bf16.mxu0 0
    %1188 = vmatmul.mubr.bf16.gmra.mrb[0].mxu0 %v1043
    %v1189 = vpop.f32.mrb[0].mxu0
    %v1190 = vadd.f32 0.0, %v1189
    %v1191 = vpop.f32.mrb[0].mxu0
    %v1192 = vpop.f32.mrb[0].mxu0
    %v1193 = vadd.f32 0.0, %v1192
    %v1194 = vpop.f32.mrb[0].mxu0
    %1195 = vmatprep.mubr.bf16.mxu0 0
    %1196 = vmatmul.mubr.bf16.gmra.mrb[0].mxu0 %v1046
    %v1197 = vpop.f32.mrb[0].mxu0
    %v1198 = vadd.f32 0.0, %v1197
    %v1199 = vpop.f32.mrb[0].mxu0
    %v1200 = vpop.f32.mrb[0].mxu0
    %v1201 = vadd.f32 0.0, %v1200
    %v1202 = vpop.f32.mrb[0].mxu0
    %1203 = vmatprep.mubr.bf16.mxu0 0
    %1204 = vmatmul.mubr.bf16.gmra.mrb[0].mxu0 %v1049
    %v1205 = vpop.f32.mrb[0].mxu0
    %v1206 = vadd.f32 0.0, %v1205
    %v1207 = vpop.f32.mrb[0].mxu0
    %v1208 = vpop.f32.mrb[0].mxu0
    %v1209 = vadd.f32 0.0, %v1208
    %v1210 = vpop.f32.mrb[0].mxu0
    %1211 = vdwg.mxu0
    %v1212 = vpack.c.bf16 %v1089, %v1086
    %v1213 = vpack.c.bf16 %v1097, %v1094
    %v1214 = vpack.c.bf16 %v1105, %v1102
    %v1215 = vpack.c.bf16 %v1113, %v1110
    %v1216 = vpack.c.bf16 %v1121, %v1118
    %v1217 = vpack.c.bf16 %v1129, %v1126
    %v1218 = vpack.c.bf16 %v1137, %v1134
    %v1219 = vpack.c.bf16 %v1145, %v1142
    %v1220 = vpack.c.bf16 %v1153, %v1150
    %v1221 = vpack.c.bf16 %v1161, %v1158
    %v1222 = vpack.c.bf16 %v1169, %v1166
    %v1223 = vpack.c.bf16 %v1177, %v1174
    %v1224 = vpack.c.bf16 %v1185, %v1182
    %v1225 = vpack.c.bf16 %v1193, %v1190
    %v1226 = vpack.c.bf16 %v1201, %v1198
    %v1227 = vpack.c.bf16 %v1209, %v1206
    %1260 = vrot.lane.b32.xlu0 %v1086, 64
    %v1261 = vpop.permute.xlu0 %1260
    %1262 = vrot.lane.b32.xlu0 %v1089, 64
    %v1263 = vpop.permute.xlu0 %1262
    %1264 = vrot.lane.b32.xlu0 %v1094, 64
    %v1265 = vpop.permute.xlu0 %1264
    %1266 = vrot.lane.b32.xlu0 %v1097, 64
    %v1267 = vpop.permute.xlu0 %1266
    %1268 = vrot.lane.b32.xlu0 %v1102, 64
    %v1269 = vpop.permute.xlu0 %1268
    %1270 = vrot.lane.b32.xlu0 %v1105, 64
    %v1271 = vpop.permute.xlu0 %1270
    %1272 = vrot.lane.b32.xlu0 %v1110, 64
    %v1273 = vpop.permute.xlu0 %1272
    %1274 = vrot.lane.b32.xlu0 %v1113, 64
    %v1275 = vpop.permute.xlu0 %1274
    %1276 = vrot.lane.b32.xlu0 %v1118, 64
    %v1277 = vpop.permute.xlu0 %1276
    %1278 = vrot.lane.b32.xlu0 %v1121, 64
    %v1279 = vpop.permute.xlu0 %1278
    %1280 = vrot.lane.b32.xlu0 %v1126, 64
    %v1281 = vpop.permute.xlu0 %1280
    %1282 = vrot.lane.b32.xlu0 %v1129, 64
    %v1283 = vpop.permute.xlu0 %1282
    %1284 = vrot.lane.b32.xlu0 %v1134, 64
    %v1285 = vpop.permute.xlu0 %1284
    %1286 = vrot.lane.b32.xlu0 %v1137, 64
    %v1287 = vpop.permute.xlu0 %1286
    %1288 = vrot.lane.b32.xlu0 %v1142, 64
    %v1289 = vpop.permute.xlu0 %1288
    %1290 = vrot.lane.b32.xlu0 %v1145, 64
    %v1291 = vpop.permute.xlu0 %1290
    %1292 = vrot.lane.b32.xlu0 %v1150, 64
    %v1293 = vpop.permute.xlu0 %1292
    %1294 = vrot.lane.b32.xlu0 %v1153, 64
    %v1295 = vpop.permute.xlu0 %1294
    %1296 = vrot.lane.b32.xlu0 %v1158, 64
    %v1297 = vpop.permute.xlu0 %1296
    %1298 = vrot.lane.b32.xlu0 %v1161, 64
    %v1299 = vpop.permute.xlu0 %1298
    %1300 = vrot.lane.b32.xlu0 %v1166, 64
    %v1301 = vpop.permute.xlu0 %1300
    %1302 = vrot.lane.b32.xlu0 %v1169, 64
    %v1303 = vpop.permute.xlu0 %1302
    %1304 = vrot.lane.b32.xlu0 %v1174, 64
    %v1305 = vpop.permute.xlu0 %1304
    %1306 = vrot.lane.b32.xlu0 %v1177, 64
    %v1307 = vpop.permute.xlu0 %1306
    %1308 = vrot.lane.b32.xlu0 %v1182, 64
    %v1309 = vpop.permute.xlu0 %1308
    %1310 = vrot.lane.b32.xlu0 %v1185, 64
    %v1311 = vpop.permute.xlu0 %1310
    %1312 = vrot.lane.b32.xlu0 %v1190, 64
    %v1313 = vpop.permute.xlu0 %1312
    %1314 = vrot.lane.b32.xlu0 %v1193, 64
    %v1315 = vpop.permute.xlu0 %1314
    %1316 = vrot.lane.b32.xlu0 %v1198, 64
    %v1317 = vpop.permute.xlu0 %1316
    %1318 = vrot.lane.b32.xlu0 %v1201, 64
    %v1319 = vpop.permute.xlu0 %1318
    %1320 = vrot.lane.b32.xlu0 %v1206, 64
    %v1321 = vpop.permute.xlu0 %1320
    %1322 = vrot.lane.b32.xlu0 %v1209, 64
    %v1323 = vpop.permute.xlu0 %1322
    %1356 = vmatprep.subr.bf16.mxu0 0
    %1357 = vmatpush1.bf16.msra.mxu0 %v1212
    %1358 = vmatprep.subr.bf16.mxu0 0
    %1359 = vmatpush1.bf16.msra.mxu0 %v1213
    %1360 = vmatprep.subr.bf16.mxu0 0
    %1361 = vmatpush1.bf16.msra.mxu0 %v1214
    %1362 = vmatprep.subr.bf16.mxu0 0
    %1363 = vmatpush1.bf16.msra.mxu0 %v1215
    %1364 = vmatprep.subr.bf16.mxu0 0
    %1365 = vmatpush1.bf16.msra.mxu0 %v1216
    %1366 = vmatprep.subr.bf16.mxu0 0
    %1367 = vmatpush1.bf16.msra.mxu0 %v1217
    %1368 = vmatprep.subr.bf16.mxu0 0
    %1369 = vmatpush1.bf16.msra.mxu0 %v1218
    %1370 = vmatprep.subr.bf16.mxu0 0
    %1371 = vmatpush1.bf16.msra.mxu0 %v1219
    %1372 = vmatprep.subr.bf16.mxu0 0
    %1373 = vmatpush1.bf16.msra.mxu0 %v1220
    %1374 = vmatprep.subr.bf16.mxu0 0
    %1375 = vmatpush1.bf16.msra.mxu0 %v1221
    %1376 = vmatprep.subr.bf16.mxu0 0
    %1377 = vmatpush1.bf16.msra.mxu0 %v1222
    %1378 = vmatprep.subr.bf16.mxu0 0
    %1379 = vmatpush1.bf16.msra.mxu0 %v1223
    %1380 = vmatprep.subr.bf16.mxu0 0
    %1381 = vmatpush1.bf16.msra.mxu0 %v1224
    %1382 = vmatprep.subr.bf16.mxu0 0
    %1383 = vmatpush1.bf16.msra.mxu0 %v1225
    %1384 = vmatprep.subr.bf16.mxu0 0
    %1385 = vmatpush1.bf16.msra.mxu0 %v1226
    %1386 = vmatprep.subr.bf16.mxu0 0
    %1387 = vmatpush1.bf16.msra.mxu0 %v1227
    %1388 = vmatprep.mubr.bf16.mxu0 %v534
    %1389 = vmatmul.mubr.bf16.gmra.mrb[0].mxu0 %v533
    %v1390 = vpop.f32.mrb[0].mxu0
    %v1391 = vadd.f32 %v1261, %v1390
    %v1392 = vpop.f32.mrb[0].mxu0
    %v1393 = vpop.f32.mrb[0].mxu0
    %v1394 = vadd.f32 %v1263, %v1393
    %v1395 = vpop.f32.mrb[0].mxu0
    %1396 = vmatprep.mubr.bf16.mxu0 %v536
    %1397 = vmatmul.mubr.bf16.gmra.mrb[0].mxu0 %v535
    %v1398 = vpop.f32.mrb[0].mxu0
    %v1399 = vadd.f32 %v1265, %v1398
    %v1400 = vpop.f32.mrb[0].mxu0
    %v1401 = vpop.f32.mrb[0].mxu0
    %v1402 = vadd.f32 %v1267, %v1401
    %v1403 = vpop.f32.mrb[0].mxu0
    %1404 = vmatprep.mubr.bf16.mxu0 %v538
    %1405 = vmatmul.mubr.bf16.gmra.mrb[0].mxu0 %v537
    %v1406 = vpop.f32.mrb[0].mxu0
    %v1407 = vadd.f32 %v1269, %v1406
    %v1408 = vpop.f32.mrb[0].mxu0
    %v1409 = vpop.f32.mrb[0].mxu0
    %v1410 = vadd.f32 %v1271, %v1409
    %v1411 = vpop.f32.mrb[0].mxu0
    %1412 = vmatprep.mubr.bf16.mxu0 %v540
    %1413 = vmatmul.mubr.bf16.gmra.mrb[0].mxu0 %v539
    %v1414 = vpop.f32.mrb[0].mxu0
    %v1415 = vadd.f32 %v1273, %v1414
    %v1416 = vpop.f32.mrb[0].mxu0
    %v1417 = vpop.f32.mrb[0].mxu0
    %v1418 = vadd.f32 %v1275, %v1417
    %v1419 = vpop.f32.mrb[0].mxu0
    %1420 = vmatprep.mubr.bf16.mxu0 %v542
    %1421 = vmatmul.mubr.bf16.gmra.mrb[0].mxu0 %v541
    %v1422 = vpop.f32.mrb[0].mxu0
    %v1423 = vadd.f32 %v1277, %v1422
    %v1424 = vpop.f32.mrb[0].mxu0
    %v1425 = vpop.f32.mrb[0].mxu0
    %v1426 = vadd.f32 %v1279, %v1425
    %v1427 = vpop.f32.mrb[0].mxu0
    %1428 = vmatprep.mubr.bf16.mxu0 %v544
    %1429 = vmatmul.mubr.bf16.gmra.mrb[0].mxu0 %v543
    %v1430 = vpop.f32.mrb[0].mxu0
    %v1431 = vadd.f32 %v1281, %v1430
    %v1432 = vpop.f32.mrb[0].mxu0
    %v1433 = vpop.f32.mrb[0].mxu0
    %v1434 = vadd.f32 %v1283, %v1433
    %v1435 = vpop.f32.mrb[0].mxu0
    %1436 = vmatprep.mubr.bf16.mxu0 %v546
    %1437 = vmatmul.mubr.bf16.gmra.mrb[0].mxu0 %v545
    %v1438 = vpop.f32.mrb[0].mxu0
    %v1439 = vadd.f32 %v1285, %v1438
    %v1440 = vpop.f32.mrb[0].mxu0
    %v1441 = vpop.f32.mrb[0].mxu0
    %v1442 = vadd.f32 %v1287, %v1441
    %v1443 = vpop.f32.mrb[0].mxu0
    %1444 = vmatprep.mubr.bf16.mxu0 %v548
    %1445 = vmatmul.mubr.bf16.gmra.mrb[0].mxu0 %v547
    %v1446 = vpop.f32.mrb[0].mxu0
    %v1447 = vadd.f32 %v1289, %v1446
    %v1448 = vpop.f32.mrb[0].mxu0
    %v1449 = vpop.f32.mrb[0].mxu0
    %v1450 = vadd.f32 %v1291, %v1449
    %v1451 = vpop.f32.mrb[0].mxu0
    %1452 = vmatprep.mubr.bf16.mxu0 %v550
    %1453 = vmatmul.mubr.bf16.gmra.mrb[0].mxu0 %v549
    %v1454 = vpop.f32.mrb[0].mxu0
    %v1455 = vadd.f32 %v1293, %v1454
    %v1456 = vpop.f32.mrb[0].mxu0
    %v1457 = vpop.f32.mrb[0].mxu0
    %v1458 = vadd.f32 %v1295, %v1457
    %v1459 = vpop.f32.mrb[0].mxu0
    %1460 = vmatprep.mubr.bf16.mxu0 %v552
    %1461 = vmatmul.mubr.bf16.gmra.mrb[0].mxu0 %v551
    %v1462 = vpop.f32.mrb[0].mxu0
    %v1463 = vadd.f32 %v1297, %v1462
    %v1464 = vpop.f32.mrb[0].mxu0
    %v1465 = vpop.f32.mrb[0].mxu0
    %v1466 = vadd.f32 %v1299, %v1465
    %v1467 = vpop.f32.mrb[0].mxu0
    %1468 = vmatprep.mubr.bf16.mxu0 %v554
    %1469 = vmatmul.mubr.bf16.gmra.mrb[0].mxu0 %v553
    %v1470 = vpop.f32.mrb[0].mxu0
    %v1471 = vadd.f32 %v1301, %v1470
    %v1472 = vpop.f32.mrb[0].mxu0
    %v1473 = vpop.f32.mrb[0].mxu0
    %v1474 = vadd.f32 %v1303, %v1473
    %v1475 = vpop.f32.mrb[0].mxu0
    %1476 = vmatprep.mubr.bf16.mxu0 %v556
    %1477 = vmatmul.mubr.bf16.gmra.mrb[0].mxu0 %v555
    %v1478 = vpop.f32.mrb[0].mxu0
    %v1479 = vadd.f32 %v1305, %v1478
    %v1480 = vpop.f32.mrb[0].mxu0
    %v1481 = vpop.f32.mrb[0].mxu0
    %v1482 = vadd.f32 %v1307, %v1481
    %v1483 = vpop.f32.mrb[0].mxu0
    %1484 = vmatprep.mubr.bf16.mxu0 %v558
    %1485 = vmatmul.mubr.bf16.gmra.mrb[0].mxu0 %v557
    %v1486 = vpop.f32.mrb[0].mxu0
    %v1487 = vadd.f32 %v1309, %v1486
    %v1488 = vpop.f32.mrb[0].mxu0
    %v1489 = vpop.f32.mrb[0].mxu0
    %v1490 = vadd.f32 %v1311, %v1489
    %v1491 = vpop.f32.mrb[0].mxu0
    %1492 = vmatprep.mubr.bf16.mxu0 %v560
    %1493 = vmatmul.mubr.bf16.gmra.mrb[0].mxu0 %v559
    %v1494 = vpop.f32.mrb[0].mxu0
    %v1495 = vadd.f32 %v1313, %v1494
    %v1496 = vpop.f32.mrb[0].mxu0
    %v1497 = vpop.f32.mrb[0].mxu0
    %v1498 = vadd.f32 %v1315, %v1497
    %v1499 = vpop.f32.mrb[0].mxu0
    %1500 = vmatprep.mubr.bf16.mxu0 %v562
    %1501 = vmatmul.mubr.bf16.gmra.mrb[0].mxu0 %v561
    %v1502 = vpop.f32.mrb[0].mxu0
    %v1503 = vadd.f32 %v1317, %v1502
    %v1504 = vpop.f32.mrb[0].mxu0
    %v1505 = vpop.f32.mrb[0].mxu0
    %v1506 = vadd.f32 %v1319, %v1505
    %v1507 = vpop.f32.mrb[0].mxu0
    %1508 = vmatprep.mubr.bf16.mxu0 %v564
    %1509 = vmatmul.mubr.bf16.gmra.mrb[0].mxu0 %v563
    %v1510 = vpop.f32.mrb[0].mxu0
    %v1511 = vadd.f32 %v1321, %v1510
    %v1512 = vpop.f32.mrb[0].mxu0
    %v1513 = vpop.f32.mrb[0].mxu0
    %v1514 = vadd.f32 %v1323, %v1513
    %v1515 = vpop.f32.mrb[0].mxu0
    %1516 = vdwg.mxu0
    %v1517 = vlaneseq
    %v1518 = vshrl.u32 %v1517, 7
    %v1519 = vsub.s32 1, %v1518
    %v1520 = vrot.slane %v106, %v1519
    %v1521 = vadd.f32 %v1391, %v1520
    %v1522 = vadd.f32 %v1394, %v1520
    %v1523 = vadd.f32 %v1399, %v1520
    %v1524 = vadd.f32 %v1402, %v1520
    %v1525 = vadd.f32 %v1407, %v1520
    %v1526 = vadd.f32 %v1410, %v1520
    %v1527 = vadd.f32 %v1415, %v1520
    %v1528 = vadd.f32 %v1418, %v1520
    %v1529 = vadd.f32 %v1423, %v1520
    %v1530 = vadd.f32 %v1426, %v1520
    %v1531 = vadd.f32 %v1431, %v1520
    %v1532 = vadd.f32 %v1434, %v1520
    %v1533 = vadd.f32 %v1439, %v1520
    %v1534 = vadd.f32 %v1442, %v1520
    %v1535 = vadd.f32 %v1447, %v1520
    %v1536 = vadd.f32 %v1450, %v1520
    %v1537 = vadd.f32 %v1455, %v1520
    %v1538 = vadd.f32 %v1458, %v1520
    %v1539 = vadd.f32 %v1463, %v1520
    %v1540 = vadd.f32 %v1466, %v1520
    %v1541 = vadd.f32 %v1471, %v1520
    %v1542 = vadd.f32 %v1474, %v1520
    %v1543 = vadd.f32 %v1479, %v1520
    %v1544 = vadd.f32 %v1482, %v1520
    %v1545 = vadd.f32 %v1487, %v1520
    %v1546 = vadd.f32 %v1490, %v1520
    %v1547 = vadd.f32 %v1495, %v1520
    %v1548 = vadd.f32 %v1498, %v1520
    %v1549 = vadd.f32 %v1503, %v1520
    %v1550 = vadd.f32 %v1506, %v1520
    %v1551 = vadd.f32 %v1511, %v1520
    %v1552 = vadd.f32 %v1514, %v1520
    %v1553 = vld [vmem:[%s1] sm:$0xff]
    %v1554 = vpack.c.bf16 %v1522, %v1521
    %v1555 = vpack.c.bf16 %v1524, %v1523
    %v1556 = vpack.c.bf16 %v1526, %v1525
    %v1557 = vpack.c.bf16 %v1528, %v1527
    %v1558 = vpack.c.bf16 %v1530, %v1529
    %v1559 = vpack.c.bf16 %v1532, %v1531
    %v1560 = vpack.c.bf16 %v1534, %v1533
    %v1561 = vpack.c.bf16 %v1536, %v1535
    %v1562 = vpack.c.bf16 %v1538, %v1537
    %v1563 = vpack.c.bf16 %v1540, %v1539
    %v1564 = vpack.c.bf16 %v1542, %v1541
    %v1565 = vpack.c.bf16 %v1544, %v1543
    %v1566 = vpack.c.bf16 %v1546, %v1545
    %v1567 = vpack.c.bf16 %v1548, %v1547
    %v1568 = vpack.c.bf16 %v1550, %v1549
    %v1569 = vpack.c.bf16 %v1552, %v1551
    %v1571 = vunpack.c.l.b16 %v1553
    %v1572 = vunpack.c.h.b16 %v1553
    %v1573 = vpack.c.b16 %v1571, %v1571
    %v1574 = vpack.c.b16 %v1572, %v1572
    %1577 = vmatprep.subr.bf16.mxu0 0
    %1578 = vmatpush1.bf16.msra.mxu0 %v1554
    %1579 = vmatprep.subr.bf16.mxu0 0
    %1580 = vmatpush1.bf16.msra.mxu0 %v1555
    %1581 = vmatprep.subr.bf16.mxu0 0
    %1582 = vmatpush1.bf16.msra.mxu0 %v1556
    %1583 = vmatprep.subr.bf16.mxu0 0
    %1584 = vmatpush1.bf16.msra.mxu0 %v1557
    %1585 = vmatprep.subr.bf16.mxu0 0
    %1586 = vmatpush1.bf16.msra.mxu0 %v1558
    %1587 = vmatprep.subr.bf16.mxu0 0
    %1588 = vmatpush1.bf16.msra.mxu0 %v1559
    %1589 = vmatprep.subr.bf16.mxu0 0
    %1590 = vmatpush1.bf16.msra.mxu0 %v1560
    %1591 = vmatprep.subr.bf16.mxu0 0
    %1592 = vmatpush1.bf16.msra.mxu0 %v1561
    %1593 = vmatprep.subr.bf16.mxu0 0
    %1594 = vmatpush1.bf16.msra.mxu0 %v1562
    %1595 = vmatprep.subr.bf16.mxu0 0
    %1596 = vmatpush1.bf16.msra.mxu0 %v1563
    %1597 = vmatprep.subr.bf16.mxu0 0
    %1598 = vmatpush1.bf16.msra.mxu0 %v1564
    %1599 = vmatprep.subr.bf16.mxu0 0
    %1600 = vmatpush1.bf16.msra.mxu0 %v1565
    %1601 = vmatprep.subr.bf16.mxu0 0
    %1602 = vmatpush1.bf16.msra.mxu0 %v1566
    %1603 = vmatprep.subr.bf16.mxu0 0
    %1604 = vmatpush1.bf16.msra.mxu0 %v1567
    %1605 = vmatprep.subr.bf16.mxu0 0
    %1606 = vmatpush1.bf16.msra.mxu0 %v1568
    %1607 = vmatprep.subr.bf16.mxu0 0
    %1608 = vmatpush1.bf16.msra.mxu0 %v1569
    %1609 = vmatprep.mubr.bf16.mxu0 %v1574
    %1610 = vmatmul.mubr.bf16.gmra.mrb[0].mxu0 %v1573
    %v1611 = vpop.f32.mrb[0].mxu0
    %v1612 = vadd.f32 0.0, %v1611
    %v1613 = vpop.f32.mrb[0].mxu0
    %v1614 = vpop.f32.mrb[0].mxu0
    %v1615 = vpop.f32.mrb[0].mxu0
    %1616 = vdwg.mxu0
    %v1617 = vpack.c.bf16 %v1612, %v1612
    %v1618 = vld [vmem:[%s5] sm:$0xf]
    %v1619 = vld [vmem:[%s5 + $0x4] sm:$0xf]
    %v1620 = vld [vmem:[%s5 + $0x8] sm:$0xf]
    %v1621 = vld [vmem:[%s5 + $0xc] sm:$0xf]
    %v1622 = vld [vmem:[%s5 + $0x10] sm:$0xf]
    %v1623 = vld [vmem:[%s5 + $0x14] sm:$0xf]
    %v1624 = vld [vmem:[%s5 + $0x18] sm:$0xf]
    %v1625 = vld [vmem:[%s5 + $0x1c] sm:$0xf]
    %v1626 = vlaneseq
    %v1627 = vshrl.u32 %v1626, 7
    %v1628 = vsub.s32 2, %v1627
    %v1629 = vrot.slane %v106, %v1628
    %v1638 = vunpack.c.l.b16 %v1618
    %v1639 = vunpack.c.l.b16 %v1619
    %v1640 = vunpack.c.l.b16 %v1620
    %v1641 = vunpack.c.l.b16 %v1621
    %v1642 = vunpack.c.l.b16 %v1622
    %v1643 = vunpack.c.l.b16 %v1623
    %v1644 = vunpack.c.l.b16 %v1624
    %v1645 = vunpack.c.l.b16 %v1625
    %v1646 = vpack.c.b16 %v1639, %v1638
    %v1647 = vpack.c.b16 %v1641, %v1640
    %v1648 = vpack.c.b16 %v1643, %v1642
    %v1649 = vpack.c.b16 %v1645, %v1644
    %v1655 = vsel %vm1002, %v1617, 0
    %1657 = vmatprep.subr.bf16.mxu0 0
    %1658 = vmatpush1.bf16.msra.mxu0 %v1646
    %1659 = vmatprep.subr.bf16.mxu0 0
    %1660 = vmatpush1.bf16.msra.mxu0 %v1647
    %1661 = vmatprep.subr.bf16.mxu0 0
    %1662 = vmatpush1.bf16.msra.mxu0 %v1648
    %1663 = vmatprep.subr.bf16.mxu0 0
    %1664 = vmatpush1.bf16.msra.mxu0 %v1649
    %1665 = vmatprep.subr.bf16.mxu0 0
    %1666 = vmatpush1.bf16.msra.mxu0 0
    %1667 = vmatprep.subr.bf16.mxu0 0
    %1668 = vmatpush1.bf16.msra.mxu0 0
    %1669 = vmatprep.subr.bf16.mxu0 0
    %1670 = vmatpush1.bf16.msra.mxu0 0
    %1671 = vmatprep.subr.bf16.mxu0 0
    %1672 = vmatpush1.bf16.msra.mxu0 0
    %1673 = vmatprep.subr.bf16.mxu0 0
    %1674 = vmatpush1.bf16.msra.mxu0 0
    %1675 = vmatprep.subr.bf16.mxu0 0
    %1676 = vmatpush1.bf16.msra.mxu0 0
    %1677 = vmatprep.subr.bf16.mxu0 0
    %1678 = vmatpush1.bf16.msra.mxu0 0
    %1679 = vmatprep.subr.bf16.mxu0 0
    %1680 = vmatpush1.bf16.msra.mxu0 0
    %1681 = vmatprep.subr.bf16.mxu0 0
    %1682 = vmatpush1.bf16.msra.mxu0 0
    %1683 = vmatprep.subr.bf16.mxu0 0
    %1684 = vmatpush1.bf16.msra.mxu0 0
    %1685 = vmatprep.subr.bf16.mxu0 0
    %1686 = vmatpush1.bf16.msra.mxu0 0
    %1687 = vmatprep.subr.bf16.mxu0 0
    %1688 = vmatpush1.bf16.msra.mxu0 0
    %1689 = vmatprep.mubr.bf16.mxu0 0
    %1690 = vmatmul.mubr.bf16.gmra.mrb[0].mxu0 %v1655
    %v1691 = vpop.f32.mrb[0].mxu0
    %v1692 = vadd.f32 %v1629, %v1691
    %v1693 = vpop.f32.mrb[0].mxu0
    %v1694 = vpop.f32.mrb[0].mxu0
    %v1695 = vpop.f32.mrb[0].mxu0
    %1696 = vdwg.mxu0
    %1697 = vst [vmem:[#allocation5] sm:$0xff] %v1692
    // Predicated region
    $region34: #{tpu_custom_call.1} parent=1 // pred_check
      _
    $region35: #{tpu_custom_call.1} parent=1 // pred_check_branch
      %1699 = sbr.rel (0) target = $region37
    $region36: #{tpu_custom_call.1} parent=1 // pred_region
      %s1701 = ssub.s32 128, 128
      %1702 = vsyncadd [#allocation4], %s1701
      %s1704 = sshll.u32 [#allocation5], 4
      %s1705 = int_to_ptr.vmem [resolvable:$true] %s1704
      %1707 = dma.vmem_to_hbm [thread:$0]  %s1705, 128, %s7, [#allocation4]
    $region37: #{tpu_custom_call.1} parent=1 // pred_fallthru
      _
    // Predicated region
    $region38: #{tpu_custom_call.1} parent=1 // pred_check
      _
    $region39: #{tpu_custom_call.1} parent=1 // pred_check_branch
      %1709 = sbr.rel (0) target = $region41
    $region40: #{tpu_custom_call.1} parent=1 // pred_region
      %1710 = dma.done [#allocation4], 128
    $region41: #{tpu_custom_call.1} parent=1 // pred_fallthru
      _
    %1711 = vsyncpa [#allocation3], 1
    %1712 = vsyncpa [#allocation4], 1

</llo_original>
